<compile_context>
chip_gen: v6e
topology: v6e:2x2x1
jax: 0.10.0
libtpu: 0.0.40
codegen_flags: <defaults>
</compile_context>

<pallas_src>
import functools

import numpy as np
import jax
import jax.numpy as jnp
from jax import lax
from jax.experimental import pallas as pl
from jax.experimental.pallas import tpu as pltpu


# ----------------------------------------------------------------------------
# Lane gather helper: out[..., i] = x[..., (i + s) % n] for a static offset s.
# (pltpu.roll follows jnp.roll semantics: out[i] = x[(i - shift) % n].)
# ----------------------------------------------------------------------------
def _gather_lanes(x, s):
    n = x.shape[-1]
    shift = (-s) % n
    if shift == 0:
        return x
    return pltpu.roll(x, shift, axis=x.ndim - 1)


# ----------------------------------------------------------------------------
# Pallas kernel: full TDN body for one video (T frames) in one shot.
# Layout: [channels (sublanes), rows (lanes)] with row index r = t*H*W + y*W + x.
# ----------------------------------------------------------------------------
def tdn_kernel(fea_ref, mtap_ref, m2tap_ref, tmask_ref,
               w1_ref, bn1_ref, w2_ref, wss2_ref, bnss2_ref,
               wss4_ref, bnss4_ref, w3_ref, bn3_ref, out_ref,
               *, H, W, T):
    f32 = jnp.float32
    HW = H * W
    R = T * HW

    F = fea_ref[...]                                        # [C, R]

    # conv1 (1x1, C -> Cr) + bn1: one MXU matmul, lane-dense N = R.
    B = jnp.dot(w1_ref[...], F, preferred_element_type=f32)
    B = B * bn1_ref[:, 0:1] + bn1_ref[:, 1:2]               # [Cr, R]

    # conv2: depthwise 3x3 = 9 lane rolls + per-channel MACs (VPU/XLU only).
    CB = jnp.zeros_like(B)
    for k in range(9):
        s = (k // 3 - 1) * W + (k % 3 - 1)
        CB = CB + w2_ref[:, k:k + 1] * _gather_lanes(B, s) * mtap_ref[k:k + 1, :R]

    # Temporal differences (+ zero padding of the missing frame); forward and
    # backward branches are fused along the lane axis -> [Cr, 2R].
    D = jnp.concatenate(
        [_gather_lanes(CB, HW) - B,        # d_f[t] = CB[t+1] - B[t]
         _gather_lanes(CB, -HW) - B],      # d_b[t] = CB[t-1] - B[t]
        axis=-1) * tmask_ref[...]

    # smallscale4 path: dense 3x3 conv, 9 taps fused into one MXU matmul.
    stack4 = jnp.concatenate(
        [_gather_lanes(D, (k // 3 - 1) * W + (k % 3 - 1)) * mtap_ref[k:k + 1, :]
         for k in range(9)], axis=0)                        # [9*Cr, 2R]
    ss4 = jnp.dot(wss4_ref[...], stack4, preferred_element_type=f32)
    ss4 = ss4 * bnss4_ref[:, 0:1] + bnss4_ref[:, 1:2]

    # smallscale2 path: avgpool2 -> 3x3 conv -> bn -> nearest 2x upsample, all
    # in the full-resolution lane layout.  Pooled values live at even/even
    # "anchor" rows; the half-res conv uses x2-dilated rolls; since everything
    # off-anchor is masked to zero, upsample is just 3 more rolls and the
    # per-channel bn (scale/bias) commutes with the nearest-upsample.
    S = 0.25 * (D + _gather_lanes(D, 1) + _gather_lanes(D, W)
                + _gather_lanes(D, W + 1))                  # block sums at anchors
    stack2 = jnp.concatenate(
        [_gather_lanes(S, 2 * ((k // 3 - 1) * W + (k % 3 - 1))) * m2tap_ref[k:k + 1, :]
         for k in range(9)], axis=0)                        # [9*Cr, 2R], 0 off-anchor
    c2 = jnp.dot(wss2_ref[...], stack2, preferred_element_type=f32)
    up = (c2 + _gather_lanes(c2, -1) + _gather_lanes(c2, -W)
          + _gather_lanes(c2, -W - 1))                      # nearest upsample
    ss2 = up * bnss2_ref[:, 0:1] + bnss2_ref[:, 1:2]

    # mix -> conv3 (1x1, Cr -> C) + bn3 -> sigmoid - 0.5; average the branches.
    mix = (D + ss2 + ss4) * (1.0 / 3.0)
    y = jnp.dot(w3_ref[...], mix, preferred_element_type=f32)
    y = y * bn3_ref[:, 0:1] + bn3_ref[:, 1:2]
    y = jax.nn.sigmoid(y) - 0.5                             # [C, 2R]
    yc = 0.5 * (y[:, :R] + y[:, R:])                        # [C, R]

    out_ref[...] = F + F * yc                               # residual: x + fea*y


# ----------------------------------------------------------------------------
# Small precomputed boundary masks (replace the old giant operator matrices).
# ----------------------------------------------------------------------------
def build_masks(T, H, W):
    HW = H * W
    R = T * HW
    ys, xs = np.divmod(np.arange(HW), W)
    y = np.tile(ys, T).astype(np.int64)
    x = np.tile(xs, T).astype(np.int64)
    anchor = (y % 2 == 0) & (x % 2 == 0)

    mtap = np.zeros((9, 2 * R), np.float32)    # full-res 3x3 tap validity
    m2tap = np.zeros((9, 2 * R), np.float32)   # half-res (dilated) tap validity
    for k in range(9):
        dy, dx = k // 3 - 1, k % 3 - 1
        v = (y + dy >= 0) & (y + dy < H) & (x + dx >= 0) & (x + dx < W)
        mtap[k] = np.tile(v.astype(np.float32), 2)
        v2 = (anchor & (y // 2 + dy >= 0) & (y // 2 + dy < H // 2)
              & (x // 2 + dx >= 0) & (x // 2 + dx < W // 2))
        m2tap[k] = np.tile(v2.astype(np.float32), 2)

    t_idx = np.repeat(np.arange(T), HW)
    tmask = np.concatenate([(t_idx < T - 1), (t_idx > 0)]).astype(np.float32)[None, :]

    return dict(mtap=jnp.asarray(mtap), m2tap=jnp.asarray(m2tap),
                tmask=jnp.asarray(tmask))


# ----------------------------------------------------------------------------
# Deterministic parameter construction (eval-mode BN folded into scale/bias).
# ----------------------------------------------------------------------------
def make_params(key, C, Cr):
    keys = jax.random.split(key, 9)

    def nrm(k, shape, s=0.2):
        return s * jax.random.normal(k, shape, jnp.float32)

    def bn(k, ch):
        k1, k2, k3, k4 = jax.random.split(k, 4)
        gamma = 1.0 + 0.1 * jax.random.normal(k1, (ch,), jnp.float32)
        beta = 0.1 * jax.random.normal(k2, (ch,), jnp.float32)
        mean = 0.1 * jax.random.normal(k3, (ch,), jnp.float32)
        var = 0.5 + jax.random.uniform(k4, (ch,), jnp.float32)
        scale = gamma / jnp.sqrt(var + 1e-5)
        bias = beta - mean * scale
        return jnp.stack([scale, bias], axis=0)            # [2, ch]

    return {
        'w1':    nrm(keys[0], (C, Cr)),         # conv1 1x1 (C -> Cr)
        'bn1':   bn(keys[1], Cr),
        'w2dw':  nrm(keys[2], (9, Cr)),         # conv2 depthwise 3x3
        'wss2':  nrm(keys[3], (9, Cr, Cr)),     # conv3_smallscale2 3x3
        'bnss2': bn(keys[4], Cr),
        'wss4':  nrm(keys[5], (9, Cr, Cr)),     # conv3_smallscale4 3x3
        'bnss4': bn(keys[6], Cr),
        'w3':    nrm(keys[7], (Cr, C)),         # conv3 1x1 (Cr -> C)
        'bn3':   bn(keys[8], C),
    }


# ----------------------------------------------------------------------------
# Wrapper: lane-dense [N, C, R] layout + pallas_call.
# ----------------------------------------------------------------------------
def tdn_pallas(x, params, masks):
    cls_tok, body = x[:1], x[1:]
    L, N, T, C = body.shape
    H = W = int(round(L ** 0.5))
    assert H * W == L and H % 2 == 0 and W % 2 == 0, (H, W)
    Cr = params['w1'].shape[1]
    R = T * L

    # [L, N, T, C] -> [N, C, T, L] -> [N, C, R]  (channels on sublanes, rows on lanes)
    fea = jnp.transpose(body, (1, 3, 2, 0)).reshape(N, C, R)

    # Re-orient the weights for the [channel, row] compute layout.
    w1k = params['w1'].T                                        # [Cr, C]
    w2k = params['w2dw'].T                                      # [Cr, 9]
    wss2k = jnp.transpose(params['wss2'], (2, 0, 1)).reshape(Cr, 9 * Cr)
    wss4k = jnp.transpose(params['wss4'], (2, 0, 1)).reshape(Cr, 9 * Cr)
    w3k = params['w3'].T                                        # [C, Cr]
    bn1k, bnss2k, bnss4k, bn3k = (params['bn1'].T, params['bnss2'].T,
                                  params['bnss4'].T, params['bn3'].T)

    full = lambda shape: pl.BlockSpec(shape, lambda n: (0,) * len(shape))
    kernel = functools.partial(tdn_kernel, H=H, W=W, T=T)

    out = pl.pallas_call(
        kernel,
        out_shape=jax.ShapeDtypeStruct((N, C, R), jnp.float32),
        grid=(N,),
        in_specs=[
            pl.BlockSpec((None, C, R), lambda n: (n, 0, 0)),   # fea (lane-dense)
            full((9, 2 * R)),        # full-res 3x3 tap masks
            full((9, 2 * R)),        # half-res (dilated) tap masks @ anchors
            full((1, 2 * R)),        # fwd/bwd temporal zero-pad mask
            full((Cr, C)),           # conv1 weight
            full((Cr, 2)),           # bn1 scale/bias
            full((Cr, 9)),           # conv2 depthwise weight
            full((Cr, 9 * Cr)),      # conv3_smallscale2 weight (tap-fused)
            full((Cr, 2)),           # bn3_smallscale2 scale/bias
            full((Cr, 9 * Cr)),      # conv3_smallscale4 weight (tap-fused)
            full((Cr, 2)),           # bn3_smallscale4 scale/bias
            full((C, Cr)),           # conv3 weight
            full((C, 2)),            # bn3 scale/bias
        ],
        out_specs=pl.BlockSpec((None, C, R), lambda n: (n, 0, 0)),
        compiler_params=pltpu.CompilerParams(dimension_semantics=("parallel",)),
    )(fea, masks['mtap'], masks['m2tap'], masks['tmask'],
      w1k, bn1k, w2k, wss2k, bnss2k, wss4k, bnss4k, w3k, bn3k)

    # [N, C, R] -> [N, C, T, L] -> [L, N, T, C]
    body_out = jnp.transpose(out.reshape(N, C, T, L), (3, 0, 2, 1))
    return jnp.concatenate([cls_tok, body_out], axis=0)


# ----------------------------------------------------------------------------
# Pure-JAX reference (NCHW, matches the PyTorch forward in eval mode).
# ----------------------------------------------------------------------------
def tdn_reference(x, params):
    cls_tok, body = x[:1], x[1:]
    L, N, T, C = body.shape
    H = W = int(round(L ** 0.5))
    Cr = params['w1'].shape[1]

    def conv(xx, w, groups=1):
        pad = 'SAME' if w.shape[-1] == 3 else 'VALID'
        return lax.conv_general_dilated(
            xx, w, window_strides=(1, 1), padding=pad,
            feature_group_count=groups,
            dimension_numbers=('NCHW', 'OIHW', 'NCHW'))

    def bn_apply(xx, sb):
        return xx * sb[0][None, :, None, None] + sb[1][None, :, None, None]

    w1 = params['w1'].T[:, :, None, None]
    w2 = params['w2dw'].T.reshape(Cr, 1, 3, 3)
    wss2 = jnp.transpose(params['wss2'].reshape(3, 3, Cr, Cr), (3, 2, 0, 1))
    wss4 = jnp.transpose(params['wss4'].reshape(3, 3, Cr, Cr), (3, 2, 0, 1))
    w3 = params['w3'].T[:, :, None, None]

    fea = jnp.transpose(body, (1, 2, 3, 0)).reshape(N * T, C, H, W)
    bottleneck = bn_apply(conv(fea, w1), params['bn1'])
    conv_b = conv(bottleneck, w2, groups=Cr)

    rb = bottleneck.reshape(N, T, Cr, H, W)
    rcb = conv_b.reshape(N, T, Cr, H, W)
    d_f = rcb[:, 1:] - rb[:, :T - 1]
    d_b = rcb[:, :T - 1] - rb[:, 1:]
    d_f = jnp.pad(d_f, ((0, 0), (0, 1), (0, 0), (0, 0), (0, 0))).reshape(N * T, Cr, H, W)
    d_b = jnp.pad(d_b, ((0, 0), (1, 0), (0, 0), (0, 0), (0, 0))).reshape(N * T, Cr, H, W)

    def avgpool2(xx):
        return lax.reduce_window(xx, 0.0, lax.add, (1, 1, 2, 2), (1, 1, 2, 2),
                                 'VALID') / 4.0

    def branch(d):
        ss2 = bn_apply(conv(avgpool2(d), wss2), params['bnss2'])
        ss4 = bn_apply(conv(d, wss4), params['bnss4'])
        ss2u = jnp.repeat(jnp.repeat(ss2, 2, axis=2), 2, axis=3)
        y = bn_apply(conv((d + ss2u + ss4) / 3.0, w3), params['bn3'])
        return jax.nn.sigmoid(y) - 0.5

    y = 0.5 * branch(d_f) + 0.5 * branch(d_b)
    attn = fea * y
    body_out = body + jnp.transpose(attn.reshape(N, T, C, L), (3, 0, 1, 2))
    return jnp.concatenate([cls_tok, body_out], axis=0)


# ----------------------------------------------------------------------------
if __name__ == "__main__":
    channel, reduction, n_segment = 16, 4, 8
    Cr = channel // reduction
    H = W = 4
    L = H * W
    N = 2

    key = jax.random.PRNGKey(0)
    kp, kx = jax.random.split(key)
    params = make_params(kp, channel, Cr)
    masks = build_masks(n_segment, H, W)

    # x layout matches the PyTorch module: [L+1 (cls first), N, T, C]
    x = jax.random.normal(kx, (L + 1, N, n_segment, channel), jnp.float32)

    out = jax.block_until_ready(tdn_pallas(x, params, masks))

    ref = tdn_reference(x, params)
    err = float(jnp.max(jnp.abs(out - ref)))
    assert out.shape == x.shape, (out.shape, x.shape)
    assert err < 2e-3, f"max abs err {err}"
    print("KERNEL_OK")
</pallas_src>

<mosaic_0001>
module attributes {stable_mosaic.version = 11 : i64} {
  func.func @tdn_kernel(%arg0: i32, %arg1: memref<1x16x128xf32, #tpu.memory_space<vmem>>, %arg2: memref<9x256xf32, #tpu.memory_space<vmem>>, %arg3: memref<9x256xf32, #tpu.memory_space<vmem>>, %arg4: memref<1x256xf32, #tpu.memory_space<vmem>>, %arg5: memref<4x16xf32, #tpu.memory_space<vmem>>, %arg6: memref<4x2xf32, #tpu.memory_space<vmem>>, %arg7: memref<4x9xf32, #tpu.memory_space<vmem>>, %arg8: memref<4x36xf32, #tpu.memory_space<vmem>>, %arg9: memref<4x2xf32, #tpu.memory_space<vmem>>, %arg10: memref<4x36xf32, #tpu.memory_space<vmem>>, %arg11: memref<4x2xf32, #tpu.memory_space<vmem>>, %arg12: memref<16x4xf32, #tpu.memory_space<vmem>>, %arg13: memref<16x2xf32, #tpu.memory_space<vmem>>, %arg14: memref<1x16x128xf32, #tpu.memory_space<vmem>>) attributes {dimension_semantics = [#tpu.dimension_semantics<parallel>], iteration_bounds = array<i64: 2>, scalar_prefetch = 0 : i64, scratch_operands = 0 : i64, tpu.core_type = #tpu.core_type<tc>, window_params = [{transform_indices = @transform_0, window_bounds = array<i64: 1, 16, 128>}, {pipeline_mode = #tpu.pipeline_mode<synchronous>, transform_indices = @transform_1, window_bounds = array<i64: 9, 256>}, {pipeline_mode = #tpu.pipeline_mode<synchronous>, transform_indices = @transform_2, window_bounds = array<i64: 9, 256>}, {pipeline_mode = #tpu.pipeline_mode<synchronous>, transform_indices = @transform_3, window_bounds = array<i64: 1, 256>}, {pipeline_mode = #tpu.pipeline_mode<synchronous>, transform_indices = @transform_4, window_bounds = array<i64: 4, 16>}, {pipeline_mode = #tpu.pipeline_mode<synchronous>, transform_indices = @transform_5, window_bounds = array<i64: 4, 2>}, {pipeline_mode = #tpu.pipeline_mode<synchronous>, transform_indices = @transform_6, window_bounds = array<i64: 4, 9>}, {pipeline_mode = #tpu.pipeline_mode<synchronous>, transform_indices = @transform_7, window_bounds = array<i64: 4, 36>}, {pipeline_mode = #tpu.pipeline_mode<synchronous>, transform_indices = @transform_8, window_bounds = array<i64: 4, 2>}, {pipeline_mode = #tpu.pipeline_mode<synchronous>, transform_indices = @transform_9, window_bounds = array<i64: 4, 36>}, {pipeline_mode = #tpu.pipeline_mode<synchronous>, transform_indices = @transform_10, window_bounds = array<i64: 4, 2>}, {pipeline_mode = #tpu.pipeline_mode<synchronous>, transform_indices = @transform_11, window_bounds = array<i64: 16, 4>}, {pipeline_mode = #tpu.pipeline_mode<synchronous>, transform_indices = @transform_12, window_bounds = array<i64: 16, 2>}, {transform_indices = @transform_13, window_bounds = array<i64: 1, 16, 128>}]} {
    %c0 = arith.constant 0 : index
    %c0_0 = arith.constant 0 : index
    %c0_1 = arith.constant 0 : index
    %0 = vector.load %arg1[%c0, %c0_0, %c0_1] : memref<1x16x128xf32, #tpu.memory_space<vmem>>, vector<1x16x128xf32>
    %1 = vector.shape_cast %0 : vector<1x16x128xf32> to vector<16x128xf32>
    %c0_2 = arith.constant 0 : index
    %c0_3 = arith.constant 0 : index
    %2 = vector.load %arg5[%c0_2, %c0_3] : memref<4x16xf32, #tpu.memory_space<vmem>>, vector<4x16xf32>
    %cst = arith.constant dense<0.000000e+00> : vector<4x128xf32>
    %3 = tpu.matmul %2, %1, %cst {dimension_numbers = #tpu.dot_dimension_numbers<[1], [0], [0], [1], [0, 0, 1, 1], [], []>} : vector<4x16xf32>, vector<16x128xf32>, vector<4x128xf32> -> vector<4x128xf32>
    %c0_4 = arith.constant 0 : index
    %c0_5 = arith.constant 0 : index
    %4 = vector.load %arg6[%c0_4, %c0_5] : memref<4x2xf32, #tpu.memory_space<vmem>>, vector<4x1xf32>
    %5 = vector.broadcast %4 : vector<4x1xf32> to vector<4x128xf32>
    %6 = arith.mulf %3, %5 : vector<4x128xf32>
    %c0_6 = arith.constant 0 : index
    %c1 = arith.constant 1 : index
    %7 = vector.load %arg6[%c0_6, %c1] : memref<4x2xf32, #tpu.memory_space<vmem>>, vector<4x1xf32>
    %8 = vector.broadcast %7 : vector<4x1xf32> to vector<4x128xf32>
    %9 = arith.addf %6, %8 : vector<4x128xf32>
    %cst_7 = arith.constant 0.000000e+00 : f32
    %10 = vector.broadcast %cst_7 : f32 to vector<4x128xf32>
    %c0_8 = arith.constant 0 : index
    %c0_9 = arith.constant 0 : index
    %11 = vector.load %arg7[%c0_8, %c0_9] : memref<4x9xf32, #tpu.memory_space<vmem>>, vector<4x1xf32>
    %c5_i32 = arith.constant 5 : i32
    %12 = tpu.dynamic_rotate %9 by %c5_i32 dim 1 : vector<4x128xf32>, i32 -> vector<4x128xf32>
    %13 = vector.broadcast %11 : vector<4x1xf32> to vector<4x128xf32>
    %14 = arith.mulf %13, %12 : vector<4x128xf32>
    %c0_10 = arith.constant 0 : index
    %c0_11 = arith.constant 0 : index
    %15 = vector.load %arg2[%c0_10, %c0_11] : memref<9x256xf32, #tpu.memory_space<vmem>>, vector<1x128xf32>
    %16 = vector.broadcast %15 : vector<1x128xf32> to vector<4x128xf32>
    %17 = arith.mulf %14, %16 : vector<4x128xf32>
    %18 = arith.addf %10, %17 : vector<4x128xf32>
    %c0_12 = arith.constant 0 : index
    %c1_13 = arith.constant 1 : index
    %19 = vector.load %arg7[%c0_12, %c1_13] : memref<4x9xf32, #tpu.memory_space<vmem>>, vector<4x1xf32>
    %c4_i32 = arith.constant 4 : i32
    %20 = tpu.dynamic_rotate %9 by %c4_i32 dim 1 : vector<4x128xf32>, i32 -> vector<4x128xf32>
    %21 = vector.broadcast %19 : vector<4x1xf32> to vector<4x128xf32>
    %22 = arith.mulf %21, %20 : vector<4x128xf32>
    %c1_14 = arith.constant 1 : index
    %c0_15 = arith.constant 0 : index
    %23 = vector.load %arg2[%c1_14, %c0_15] : memref<9x256xf32, #tpu.memory_space<vmem>>, vector<1x128xf32>
    %24 = vector.broadcast %23 : vector<1x128xf32> to vector<4x128xf32>
    %25 = arith.mulf %22, %24 : vector<4x128xf32>
    %26 = arith.addf %18, %25 : vector<4x128xf32>
    %c0_16 = arith.constant 0 : index
    %c2 = arith.constant 2 : index
    %27 = vector.load %arg7[%c0_16, %c2] : memref<4x9xf32, #tpu.memory_space<vmem>>, vector<4x1xf32>
    %c3_i32 = arith.constant 3 : i32
    %28 = tpu.dynamic_rotate %9 by %c3_i32 dim 1 : vector<4x128xf32>, i32 -> vector<4x128xf32>
    %29 = vector.broadcast %27 : vector<4x1xf32> to vector<4x128xf32>
    %30 = arith.mulf %29, %28 : vector<4x128xf32>
    %c2_17 = arith.constant 2 : index
    %c0_18 = arith.constant 0 : index
    %31 = vector.load %arg2[%c2_17, %c0_18] : memref<9x256xf32, #tpu.memory_space<vmem>>, vector<1x128xf32>
    %32 = vector.broadcast %31 : vector<1x128xf32> to vector<4x128xf32>
    %33 = arith.mulf %30, %32 : vector<4x128xf32>
    %34 = arith.addf %26, %33 : vector<4x128xf32>
    %c0_19 = arith.constant 0 : index
    %c3 = arith.constant 3 : index
    %35 = vector.load %arg7[%c0_19, %c3] : memref<4x9xf32, #tpu.memory_space<vmem>>, vector<4x1xf32>
    %c1_i32 = arith.constant 1 : i32
    %36 = tpu.dynamic_rotate %9 by %c1_i32 dim 1 : vector<4x128xf32>, i32 -> vector<4x128xf32>
    %37 = vector.broadcast %35 : vector<4x1xf32> to vector<4x128xf32>
    %38 = arith.mulf %37, %36 : vector<4x128xf32>
    %c3_20 = arith.constant 3 : index
    %c0_21 = arith.constant 0 : index
    %39 = vector.load %arg2[%c3_20, %c0_21] : memref<9x256xf32, #tpu.memory_space<vmem>>, vector<1x128xf32>
    %40 = vector.broadcast %39 : vector<1x128xf32> to vector<4x128xf32>
    %41 = arith.mulf %38, %40 : vector<4x128xf32>
    %42 = arith.addf %34, %41 : vector<4x128xf32>
    %c0_22 = arith.constant 0 : index
    %c4 = arith.constant 4 : index
    %43 = vector.load %arg7[%c0_22, %c4] : memref<4x9xf32, #tpu.memory_space<vmem>>, vector<4x1xf32>
    %44 = vector.broadcast %43 : vector<4x1xf32> to vector<4x128xf32>
    %45 = arith.mulf %44, %9 : vector<4x128xf32>
    %c4_23 = arith.constant 4 : index
    %c0_24 = arith.constant 0 : index
    %46 = vector.load %arg2[%c4_23, %c0_24] : memref<9x256xf32, #tpu.memory_space<vmem>>, vector<1x128xf32>
    %47 = vector.broadcast %46 : vector<1x128xf32> to vector<4x128xf32>
    %48 = arith.mulf %45, %47 : vector<4x128xf32>
    %49 = arith.addf %42, %48 : vector<4x128xf32>
    %c0_25 = arith.constant 0 : index
    %c5 = arith.constant 5 : index
    %50 = vector.load %arg7[%c0_25, %c5] : memref<4x9xf32, #tpu.memory_space<vmem>>, vector<4x1xf32>
    %c127_i32 = arith.constant 127 : i32
    %51 = tpu.dynamic_rotate %9 by %c127_i32 dim 1 : vector<4x128xf32>, i32 -> vector<4x128xf32>
    %52 = vector.broadcast %50 : vector<4x1xf32> to vector<4x128xf32>
    %53 = arith.mulf %52, %51 : vector<4x128xf32>
    %c5_26 = arith.constant 5 : index
    %c0_27 = arith.constant 0 : index
    %54 = vector.load %arg2[%c5_26, %c0_27] : memref<9x256xf32, #tpu.memory_space<vmem>>, vector<1x128xf32>
    %55 = vector.broadcast %54 : vector<1x128xf32> to vector<4x128xf32>
    %56 = arith.mulf %53, %55 : vector<4x128xf32>
    %57 = arith.addf %49, %56 : vector<4x128xf32>
    %c0_28 = arith.constant 0 : index
    %c6 = arith.constant 6 : index
    %58 = vector.load %arg7[%c0_28, %c6] : memref<4x9xf32, #tpu.memory_space<vmem>>, vector<4x1xf32>
    %c125_i32 = arith.constant 125 : i32
    %59 = tpu.dynamic_rotate %9 by %c125_i32 dim 1 : vector<4x128xf32>, i32 -> vector<4x128xf32>
    %60 = vector.broadcast %58 : vector<4x1xf32> to vector<4x128xf32>
    %61 = arith.mulf %60, %59 : vector<4x128xf32>
    %c6_29 = arith.constant 6 : index
    %c0_30 = arith.constant 0 : index
    %62 = vector.load %arg2[%c6_29, %c0_30] : memref<9x256xf32, #tpu.memory_space<vmem>>, vector<1x128xf32>
    %63 = vector.broadcast %62 : vector<1x128xf32> to vector<4x128xf32>
    %64 = arith.mulf %61, %63 : vector<4x128xf32>
    %65 = arith.addf %57, %64 : vector<4x128xf32>
    %c0_31 = arith.constant 0 : index
    %c7 = arith.constant 7 : index
    %66 = vector.load %arg7[%c0_31, %c7] : memref<4x9xf32, #tpu.memory_space<vmem>>, vector<4x1xf32>
    %c124_i32 = arith.constant 124 : i32
    %67 = tpu.dynamic_rotate %9 by %c124_i32 dim 1 : vector<4x128xf32>, i32 -> vector<4x128xf32>
    %68 = vector.broadcast %66 : vector<4x1xf32> to vector<4x128xf32>
    %69 = arith.mulf %68, %67 : vector<4x128xf32>
    %c7_32 = arith.constant 7 : index
    %c0_33 = arith.constant 0 : index
    %70 = vector.load %arg2[%c7_32, %c0_33] : memref<9x256xf32, #tpu.memory_space<vmem>>, vector<1x128xf32>
    %71 = vector.broadcast %70 : vector<1x128xf32> to vector<4x128xf32>
    %72 = arith.mulf %69, %71 : vector<4x128xf32>
    %73 = arith.addf %65, %72 : vector<4x128xf32>
    %c0_34 = arith.constant 0 : index
    %c8 = arith.constant 8 : index
    %74 = vector.load %arg7[%c0_34, %c8] : memref<4x9xf32, #tpu.memory_space<vmem>>, vector<4x1xf32>
    %c123_i32 = arith.constant 123 : i32
    %75 = tpu.dynamic_rotate %9 by %c123_i32 dim 1 : vector<4x128xf32>, i32 -> vector<4x128xf32>
    %76 = vector.broadcast %74 : vector<4x1xf32> to vector<4x128xf32>
    %77 = arith.mulf %76, %75 : vector<4x128xf32>
    %c8_35 = arith.constant 8 : index
    %c0_36 = arith.constant 0 : index
    %78 = vector.load %arg2[%c8_35, %c0_36] : memref<9x256xf32, #tpu.memory_space<vmem>>, vector<1x128xf32>
    %79 = vector.broadcast %78 : vector<1x128xf32> to vector<4x128xf32>
    %80 = arith.mulf %77, %79 : vector<4x128xf32>
    %81 = arith.addf %73, %80 : vector<4x128xf32>
    %c112_i32 = arith.constant 112 : i32
    %82 = tpu.dynamic_rotate %81 by %c112_i32 dim 1 : vector<4x128xf32>, i32 -> vector<4x128xf32>
    %83 = arith.subf %82, %9 : vector<4x128xf32>
    %c16_i32 = arith.constant 16 : i32
    %84 = tpu.dynamic_rotate %81 by %c16_i32 dim 1 : vector<4x128xf32>, i32 -> vector<4x128xf32>
    %85 = arith.subf %84, %9 : vector<4x128xf32>
    %86 = tpu.concatenate %83, %85 in 1 : vector<4x128xf32>, vector<4x128xf32> -> vector<4x256xf32>
    %c0_37 = arith.constant 0 : index
    %c0_38 = arith.constant 0 : index
    %87 = vector.load %arg4[%c0_37, %c0_38] : memref<1x256xf32, #tpu.memory_space<vmem>>, vector<1x256xf32>
    %88 = vector.broadcast %87 : vector<1x256xf32> to vector<4x256xf32>
    %89 = arith.mulf %86, %88 : vector<4x256xf32>
    %c5_i32_39 = arith.constant 5 : i32
    %90 = tpu.dynamic_rotate %89 by %c5_i32_39 dim 1 : vector<4x256xf32>, i32 -> vector<4x256xf32>
    %c0_40 = arith.constant 0 : index
    %c0_41 = arith.constant 0 : index
    %91 = vector.load %arg2[%c0_40, %c0_41] : memref<9x256xf32, #tpu.memory_space<vmem>>, vector<1x256xf32>
    %92 = vector.broadcast %91 : vector<1x256xf32> to vector<4x256xf32>
    %93 = arith.mulf %90, %92 : vector<4x256xf32>
    %c4_i32_42 = arith.constant 4 : i32
    %94 = tpu.dynamic_rotate %89 by %c4_i32_42 dim 1 : vector<4x256xf32>, i32 -> vector<4x256xf32>
    %c1_43 = arith.constant 1 : index
    %c0_44 = arith.constant 0 : index
    %95 = vector.load %arg2[%c1_43, %c0_44] : memref<9x256xf32, #tpu.memory_space<vmem>>, vector<1x256xf32>
    %96 = vector.broadcast %95 : vector<1x256xf32> to vector<4x256xf32>
    %97 = arith.mulf %94, %96 : vector<4x256xf32>
    %c3_i32_45 = arith.constant 3 : i32
    %98 = tpu.dynamic_rotate %89 by %c3_i32_45 dim 1 : vector<4x256xf32>, i32 -> vector<4x256xf32>
    %c2_46 = arith.constant 2 : index
    %c0_47 = arith.constant 0 : index
    %99 = vector.load %arg2[%c2_46, %c0_47] : memref<9x256xf32, #tpu.memory_space<vmem>>, vector<1x256xf32>
    %100 = vector.broadcast %99 : vector<1x256xf32> to vector<4x256xf32>
    %101 = arith.mulf %98, %100 : vector<4x256xf32>
    %c1_i32_48 = arith.constant 1 : i32
    %102 = tpu.dynamic_rotate %89 by %c1_i32_48 dim 1 : vector<4x256xf32>, i32 -> vector<4x256xf32>
    %c3_49 = arith.constant 3 : index
    %c0_50 = arith.constant 0 : index
    %103 = vector.load %arg2[%c3_49, %c0_50] : memref<9x256xf32, #tpu.memory_space<vmem>>, vector<1x256xf32>
    %104 = vector.broadcast %103 : vector<1x256xf32> to vector<4x256xf32>
    %105 = arith.mulf %102, %104 : vector<4x256xf32>
    %c4_51 = arith.constant 4 : index
    %c0_52 = arith.constant 0 : index
    %106 = vector.load %arg2[%c4_51, %c0_52] : memref<9x256xf32, #tpu.memory_space<vmem>>, vector<1x256xf32>
    %107 = vector.broadcast %106 : vector<1x256xf32> to vector<4x256xf32>
    %108 = arith.mulf %89, %107 : vector<4x256xf32>
    %c255_i32 = arith.constant 255 : i32
    %109 = tpu.dynamic_rotate %89 by %c255_i32 dim 1 : vector<4x256xf32>, i32 -> vector<4x256xf32>
    %c5_53 = arith.constant 5 : index
    %c0_54 = arith.constant 0 : index
    %110 = vector.load %arg2[%c5_53, %c0_54] : memref<9x256xf32, #tpu.memory_space<vmem>>, vector<1x256xf32>
    %111 = vector.broadcast %110 : vector<1x256xf32> to vector<4x256xf32>
    %112 = arith.mulf %109, %111 : vector<4x256xf32>
    %c253_i32 = arith.constant 253 : i32
    %113 = tpu.dynamic_rotate %89 by %c253_i32 dim 1 : vector<4x256xf32>, i32 -> vector<4x256xf32>
    %c6_55 = arith.constant 6 : index
    %c0_56 = arith.constant 0 : index
    %114 = vector.load %arg2[%c6_55, %c0_56] : memref<9x256xf32, #tpu.memory_space<vmem>>, vector<1x256xf32>
    %115 = vector.broadcast %114 : vector<1x256xf32> to vector<4x256xf32>
    %116 = arith.mulf %113, %115 : vector<4x256xf32>
    %c252_i32 = arith.constant 252 : i32
    %117 = tpu.dynamic_rotate %89 by %c252_i32 dim 1 : vector<4x256xf32>, i32 -> vector<4x256xf32>
    %c7_57 = arith.constant 7 : index
    %c0_58 = arith.constant 0 : index
    %118 = vector.load %arg2[%c7_57, %c0_58] : memref<9x256xf32, #tpu.memory_space<vmem>>, vector<1x256xf32>
    %119 = vector.broadcast %118 : vector<1x256xf32> to vector<4x256xf32>
    %120 = arith.mulf %117, %119 : vector<4x256xf32>
    %c251_i32 = arith.constant 251 : i32
    %121 = tpu.dynamic_rotate %89 by %c251_i32 dim 1 : vector<4x256xf32>, i32 -> vector<4x256xf32>
    %c8_59 = arith.constant 8 : index
    %c0_60 = arith.constant 0 : index
    %122 = vector.load %arg2[%c8_59, %c0_60] : memref<9x256xf32, #tpu.memory_space<vmem>>, vector<1x256xf32>
    %123 = vector.broadcast %122 : vector<1x256xf32> to vector<4x256xf32>
    %124 = arith.mulf %121, %123 : vector<4x256xf32>
    %125 = tpu.concatenate %93, %97, %101, %105, %108, %112, %116, %120, %124 in 0 : vector<4x256xf32>, vector<4x256xf32>, vector<4x256xf32>, vector<4x256xf32>, vector<4x256xf32>, vector<4x256xf32>, vector<4x256xf32>, vector<4x256xf32>, vector<4x256xf32> -> vector<36x256xf32>
    %c0_61 = arith.constant 0 : index
    %c0_62 = arith.constant 0 : index
    %126 = vector.load %arg10[%c0_61, %c0_62] : memref<4x36xf32, #tpu.memory_space<vmem>>, vector<4x36xf32>
    %cst_63 = arith.constant dense<0.000000e+00> : vector<4x256xf32>
    %127 = tpu.matmul %126, %125, %cst_63 {dimension_numbers = #tpu.dot_dimension_numbers<[1], [0], [0], [1], [0, 0, 1, 1], [], []>} : vector<4x36xf32>, vector<36x256xf32>, vector<4x256xf32> -> vector<4x256xf32>
    %c0_64 = arith.constant 0 : index
    %c0_65 = arith.constant 0 : index
    %128 = vector.load %arg11[%c0_64, %c0_65] : memref<4x2xf32, #tpu.memory_space<vmem>>, vector<4x1xf32>
    %129 = vector.broadcast %128 : vector<4x1xf32> to vector<4x256xf32>
    %130 = arith.mulf %127, %129 : vector<4x256xf32>
    %c0_66 = arith.constant 0 : index
    %c1_67 = arith.constant 1 : index
    %131 = vector.load %arg11[%c0_66, %c1_67] : memref<4x2xf32, #tpu.memory_space<vmem>>, vector<4x1xf32>
    %132 = vector.broadcast %131 : vector<4x1xf32> to vector<4x256xf32>
    %133 = arith.addf %130, %132 : vector<4x256xf32>
    %c255_i32_68 = arith.constant 255 : i32
    %134 = tpu.dynamic_rotate %89 by %c255_i32_68 dim 1 : vector<4x256xf32>, i32 -> vector<4x256xf32>
    %135 = arith.addf %89, %134 : vector<4x256xf32>
    %c252_i32_69 = arith.constant 252 : i32
    %136 = tpu.dynamic_rotate %89 by %c252_i32_69 dim 1 : vector<4x256xf32>, i32 -> vector<4x256xf32>
    %137 = arith.addf %135, %136 : vector<4x256xf32>
    %c251_i32_70 = arith.constant 251 : i32
    %138 = tpu.dynamic_rotate %89 by %c251_i32_70 dim 1 : vector<4x256xf32>, i32 -> vector<4x256xf32>
    %139 = arith.addf %137, %138 : vector<4x256xf32>
    %cst_71 = arith.constant 2.500000e-01 : f32
    %140 = vector.broadcast %cst_71 : f32 to vector<4x256xf32>
    %141 = arith.mulf %140, %139 : vector<4x256xf32>
    %c10_i32 = arith.constant 10 : i32
    %142 = tpu.dynamic_rotate %141 by %c10_i32 dim 1 : vector<4x256xf32>, i32 -> vector<4x256xf32>
    %c0_72 = arith.constant 0 : index
    %c0_73 = arith.constant 0 : index
    %143 = vector.load %arg3[%c0_72, %c0_73] : memref<9x256xf32, #tpu.memory_space<vmem>>, vector<1x256xf32>
    %144 = vector.broadcast %143 : vector<1x256xf32> to vector<4x256xf32>
    %145 = arith.mulf %142, %144 : vector<4x256xf32>
    %c8_i32 = arith.constant 8 : i32
    %146 = tpu.dynamic_rotate %141 by %c8_i32 dim 1 : vector<4x256xf32>, i32 -> vector<4x256xf32>
    %c1_74 = arith.constant 1 : index
    %c0_75 = arith.constant 0 : index
    %147 = vector.load %arg3[%c1_74, %c0_75] : memref<9x256xf32, #tpu.memory_space<vmem>>, vector<1x256xf32>
    %148 = vector.broadcast %147 : vector<1x256xf32> to vector<4x256xf32>
    %149 = arith.mulf %146, %148 : vector<4x256xf32>
    %c6_i32 = arith.constant 6 : i32
    %150 = tpu.dynamic_rotate %141 by %c6_i32 dim 1 : vector<4x256xf32>, i32 -> vector<4x256xf32>
    %c2_76 = arith.constant 2 : index
    %c0_77 = arith.constant 0 : index
    %151 = vector.load %arg3[%c2_76, %c0_77] : memref<9x256xf32, #tpu.memory_space<vmem>>, vector<1x256xf32>
    %152 = vector.broadcast %151 : vector<1x256xf32> to vector<4x256xf32>
    %153 = arith.mulf %150, %152 : vector<4x256xf32>
    %c2_i32 = arith.constant 2 : i32
    %154 = tpu.dynamic_rotate %141 by %c2_i32 dim 1 : vector<4x256xf32>, i32 -> vector<4x256xf32>
    %c3_78 = arith.constant 3 : index
    %c0_79 = arith.constant 0 : index
    %155 = vector.load %arg3[%c3_78, %c0_79] : memref<9x256xf32, #tpu.memory_space<vmem>>, vector<1x256xf32>
    %156 = vector.broadcast %155 : vector<1x256xf32> to vector<4x256xf32>
    %157 = arith.mulf %154, %156 : vector<4x256xf32>
    %c4_80 = arith.constant 4 : index
    %c0_81 = arith.constant 0 : index
    %158 = vector.load %arg3[%c4_80, %c0_81] : memref<9x256xf32, #tpu.memory_space<vmem>>, vector<1x256xf32>
    %159 = vector.broadcast %158 : vector<1x256xf32> to vector<4x256xf32>
    %160 = arith.mulf %141, %159 : vector<4x256xf32>
    %c254_i32 = arith.constant 254 : i32
    %161 = tpu.dynamic_rotate %141 by %c254_i32 dim 1 : vector<4x256xf32>, i32 -> vector<4x256xf32>
    %c5_82 = arith.constant 5 : index
    %c0_83 = arith.constant 0 : index
    %162 = vector.load %arg3[%c5_82, %c0_83] : memref<9x256xf32, #tpu.memory_space<vmem>>, vector<1x256xf32>
    %163 = vector.broadcast %162 : vector<1x256xf32> to vector<4x256xf32>
    %164 = arith.mulf %161, %163 : vector<4x256xf32>
    %c250_i32 = arith.constant 250 : i32
    %165 = tpu.dynamic_rotate %141 by %c250_i32 dim 1 : vector<4x256xf32>, i32 -> vector<4x256xf32>
    %c6_84 = arith.constant 6 : index
    %c0_85 = arith.constant 0 : index
    %166 = vector.load %arg3[%c6_84, %c0_85] : memref<9x256xf32, #tpu.memory_space<vmem>>, vector<1x256xf32>
    %167 = vector.broadcast %166 : vector<1x256xf32> to vector<4x256xf32>
    %168 = arith.mulf %165, %167 : vector<4x256xf32>
    %c248_i32 = arith.constant 248 : i32
    %169 = tpu.dynamic_rotate %141 by %c248_i32 dim 1 : vector<4x256xf32>, i32 -> vector<4x256xf32>
    %c7_86 = arith.constant 7 : index
    %c0_87 = arith.constant 0 : index
    %170 = vector.load %arg3[%c7_86, %c0_87] : memref<9x256xf32, #tpu.memory_space<vmem>>, vector<1x256xf32>
    %171 = vector.broadcast %170 : vector<1x256xf32> to vector<4x256xf32>
    %172 = arith.mulf %169, %171 : vector<4x256xf32>
    %c246_i32 = arith.constant 246 : i32
    %173 = tpu.dynamic_rotate %141 by %c246_i32 dim 1 : vector<4x256xf32>, i32 -> vector<4x256xf32>
    %c8_88 = arith.constant 8 : index
    %c0_89 = arith.constant 0 : index
    %174 = vector.load %arg3[%c8_88, %c0_89] : memref<9x256xf32, #tpu.memory_space<vmem>>, vector<1x256xf32>
    %175 = vector.broadcast %174 : vector<1x256xf32> to vector<4x256xf32>
    %176 = arith.mulf %173, %175 : vector<4x256xf32>
    %177 = tpu.concatenate %145, %149, %153, %157, %160, %164, %168, %172, %176 in 0 : vector<4x256xf32>, vector<4x256xf32>, vector<4x256xf32>, vector<4x256xf32>, vector<4x256xf32>, vector<4x256xf32>, vector<4x256xf32>, vector<4x256xf32>, vector<4x256xf32> -> vector<36x256xf32>
    %c0_90 = arith.constant 0 : index
    %c0_91 = arith.constant 0 : index
    %178 = vector.load %arg8[%c0_90, %c0_91] : memref<4x36xf32, #tpu.memory_space<vmem>>, vector<4x36xf32>
    %cst_92 = arith.constant dense<0.000000e+00> : vector<4x256xf32>
    %179 = tpu.matmul %178, %177, %cst_92 {dimension_numbers = #tpu.dot_dimension_numbers<[1], [0], [0], [1], [0, 0, 1, 1], [], []>} : vector<4x36xf32>, vector<36x256xf32>, vector<4x256xf32> -> vector<4x256xf32>
    %c1_i32_93 = arith.constant 1 : i32
    %180 = tpu.dynamic_rotate %179 by %c1_i32_93 dim 1 : vector<4x256xf32>, i32 -> vector<4x256xf32>
    %181 = arith.addf %179, %180 : vector<4x256xf32>
    %c4_i32_94 = arith.constant 4 : i32
    %182 = tpu.dynamic_rotate %179 by %c4_i32_94 dim 1 : vector<4x256xf32>, i32 -> vector<4x256xf32>
    %183 = arith.addf %181, %182 : vector<4x256xf32>
    %c5_i32_95 = arith.constant 5 : i32
    %184 = tpu.dynamic_rotate %179 by %c5_i32_95 dim 1 : vector<4x256xf32>, i32 -> vector<4x256xf32>
    %185 = arith.addf %183, %184 : vector<4x256xf32>
    %c0_96 = arith.constant 0 : index
    %c0_97 = arith.constant 0 : index
    %186 = vector.load %arg9[%c0_96, %c0_97] : memref<4x2xf32, #tpu.memory_space<vmem>>, vector<4x1xf32>
    %187 = vector.broadcast %186 : vector<4x1xf32> to vector<4x256xf32>
    %188 = arith.mulf %185, %187 : vector<4x256xf32>
    %c0_98 = arith.constant 0 : index
    %c1_99 = arith.constant 1 : index
    %189 = vector.load %arg9[%c0_98, %c1_99] : memref<4x2xf32, #tpu.memory_space<vmem>>, vector<4x1xf32>
    %190 = vector.broadcast %189 : vector<4x1xf32> to vector<4x256xf32>
    %191 = arith.addf %188, %190 : vector<4x256xf32>
    %192 = arith.addf %89, %191 : vector<4x256xf32>
    %193 = arith.addf %192, %133 : vector<4x256xf32>
    %cst_100 = arith.constant 0.333333343 : f32
    %194 = vector.broadcast %cst_100 : f32 to vector<4x256xf32>
    %195 = arith.mulf %193, %194 : vector<4x256xf32>
    %c0_101 = arith.constant 0 : index
    %c0_102 = arith.constant 0 : index
    %196 = vector.load %arg12[%c0_101, %c0_102] : memref<16x4xf32, #tpu.memory_space<vmem>>, vector<16x4xf32>
    %cst_103 = arith.constant dense<0.000000e+00> : vector<16x256xf32>
    %197 = tpu.matmul %196, %195, %cst_103 {dimension_numbers = #tpu.dot_dimension_numbers<[1], [0], [0], [1], [0, 0, 1, 1], [], []>} : vector<16x4xf32>, vector<4x256xf32>, vector<16x256xf32> -> vector<16x256xf32>
    %c0_104 = arith.constant 0 : index
    %c0_105 = arith.constant 0 : index
    %198 = vector.load %arg13[%c0_104, %c0_105] : memref<16x2xf32, #tpu.memory_space<vmem>>, vector<16x1xf32>
    %199 = vector.broadcast %198 : vector<16x1xf32> to vector<16x256xf32>
    %200 = arith.mulf %197, %199 : vector<16x256xf32>
    %c0_106 = arith.constant 0 : index
    %c1_107 = arith.constant 1 : index
    %201 = vector.load %arg13[%c0_106, %c1_107] : memref<16x2xf32, #tpu.memory_space<vmem>>, vector<16x1xf32>
    %202 = vector.broadcast %201 : vector<16x1xf32> to vector<16x256xf32>
    %203 = arith.addf %200, %202 : vector<16x256xf32>
    %204 = arith.negf %203 : vector<16x256xf32>
    %205 = math.exp %204 : vector<16x256xf32>
    %cst_108 = arith.constant 1.000000e+00 : f32
    %206 = vector.broadcast %cst_108 : f32 to vector<16x256xf32>
    %207 = arith.addf %206, %205 : vector<16x256xf32>
    %208 = arith.divf %206, %207 : vector<16x256xf32>
    %cst_109 = arith.constant 5.000000e-01 : f32
    %209 = vector.broadcast %cst_109 : f32 to vector<16x256xf32>
    %210 = arith.subf %208, %209 : vector<16x256xf32>
    %211 = vector.extract_strided_slice %210 {offsets = [0, 0], sizes = [16, 128], strides = [1, 1]} : vector<16x256xf32> to vector<16x128xf32>
    %212 = vector.extract_strided_slice %210 {offsets = [0, 128], sizes = [16, 128], strides = [1, 1]} : vector<16x256xf32> to vector<16x128xf32>
    %213 = arith.addf %211, %212 : vector<16x128xf32>
    %cst_110 = arith.constant 5.000000e-01 : f32
    %214 = vector.broadcast %cst_110 : f32 to vector<16x128xf32>
    %215 = arith.mulf %214, %213 : vector<16x128xf32>
    %216 = arith.mulf %1, %215 : vector<16x128xf32>
    %217 = arith.addf %1, %216 : vector<16x128xf32>
    %c0_111 = arith.constant 0 : index
    %c0_112 = arith.constant 0 : index
    %c0_113 = arith.constant 0 : index
    %218 = vector.load %arg14[%c0_111, %c0_112, %c0_113] : memref<1x16x128xf32, #tpu.memory_space<vmem>>, vector<1x16x128xf32>
    %219 = vector.shape_cast %218 : vector<1x16x128xf32> to vector<16x128xf32>
    %220 = vector.shape_cast %217 : vector<16x128xf32> to vector<1x16x128xf32>
    tpu.vector_store %arg14[%c0_111, %c0_112, %c0_113], %220 {strides = array<i32>} : memref<1x16x128xf32, #tpu.memory_space<vmem>>, vector<1x16x128xf32>,
    return
  }
  func.func @transform_0(%arg0: i32) -> (i32, i32, i32) {
    %c0_i32 = arith.constant 0 : i32
    %c0_i32_0 = arith.constant 0 : i32
    %c0_i32_1 = arith.constant 0 : i32
    return %arg0, %c0_i32, %c0_i32_0 : i32, i32, i32
  }
  func.func @transform_1(%arg0: i32) -> (i32, i32) {
    %c0_i32 = arith.constant 0 : i32
    %c0_i32_0 = arith.constant 0 : i32
    %c0_i32_1 = arith.constant 0 : i32
    return %c0_i32, %c0_i32_0 : i32, i32
  }
  func.func @transform_2(%arg0: i32) -> (i32, i32) {
    %c0_i32 = arith.constant 0 : i32
    %c0_i32_0 = arith.constant 0 : i32
    %c0_i32_1 = arith.constant 0 : i32
    return %c0_i32, %c0_i32_0 : i32, i32
  }
  func.func @transform_3(%arg0: i32) -> (i32, i32) {
    %c0_i32 = arith.constant 0 : i32
    %c0_i32_0 = arith.constant 0 : i32
    %c0_i32_1 = arith.constant 0 : i32
    return %c0_i32, %c0_i32_0 : i32, i32
  }
  func.func @transform_4(%arg0: i32) -> (i32, i32) {
    %c0_i32 = arith.constant 0 : i32
    %c0_i32_0 = arith.constant 0 : i32
    %c0_i32_1 = arith.constant 0 : i32
    return %c0_i32, %c0_i32_0 : i32, i32
  }
  func.func @transform_5(%arg0: i32) -> (i32, i32) {
    %c0_i32 = arith.constant 0 : i32
    %c0_i32_0 = arith.constant 0 : i32
    %c0_i32_1 = arith.constant 0 : i32
    return %c0_i32, %c0_i32_0 : i32, i32
  }
  func.func @transform_6(%arg0: i32) -> (i32, i32) {
    %c0_i32 = arith.constant 0 : i32
    %c0_i32_0 = arith.constant 0 : i32
    %c0_i32_1 = arith.constant 0 : i32
    return %c0_i32, %c0_i32_0 : i32, i32
  }
  func.func @transform_7(%arg0: i32) -> (i32, i32) {
    %c0_i32 = arith.constant 0 : i32
    %c0_i32_0 = arith.constant 0 : i32
    %c0_i32_1 = arith.constant 0 : i32
    return %c0_i32, %c0_i32_0 : i32, i32
  }
  func.func @transform_8(%arg0: i32) -> (i32, i32) {
    %c0_i32 = arith.constant 0 : i32
    %c0_i32_0 = arith.constant 0 : i32
    %c0_i32_1 = arith.constant 0 : i32
    return %c0_i32, %c0_i32_0 : i32, i32
  }
  func.func @transform_9(%arg0: i32) -> (i32, i32) {
    %c0_i32 = arith.constant 0 : i32
    %c0_i32_0 = arith.constant 0 : i32
    %c0_i32_1 = arith.constant 0 : i32
    return %c0_i32, %c0_i32_0 : i32, i32
  }
  func.func @transform_10(%arg0: i32) -> (i32, i32) {
    %c0_i32 = arith.constant 0 : i32
    %c0_i32_0 = arith.constant 0 : i32
    %c0_i32_1 = arith.constant 0 : i32
    return %c0_i32, %c0_i32_0 : i32, i32
  }
  func.func @transform_11(%arg0: i32) -> (i32, i32) {
    %c0_i32 = arith.constant 0 : i32
    %c0_i32_0 = arith.constant 0 : i32
    %c0_i32_1 = arith.constant 0 : i32
    return %c0_i32, %c0_i32_0 : i32, i32
  }
  func.func @transform_12(%arg0: i32) -> (i32, i32) {
    %c0_i32 = arith.constant 0 : i32
    %c0_i32_0 = arith.constant 0 : i32
    %c0_i32_1 = arith.constant 0 : i32
    return %c0_i32, %c0_i32_0 : i32, i32
  }
  func.func @transform_13(%arg0: i32) -> (i32, i32, i32) {
    %c0_i32 = arith.constant 0 : i32
    %c0_i32_0 = arith.constant 0 : i32
    %c0_i32_1 = arith.constant 0 : i32
    return %arg0, %c0_i32, %c0_i32_0 : i32, i32, i32
  }
}

</mosaic_0001>

<llo_original>
// kernel: tpu_custom_call.1
$region0: #{tpu_custom_call.1}
  #allocation0 [shape = 'u32[]', space=smem, size = 0x4, offset = 0x4, fixed_abs, tag = 'smem constant byte address 0x4 - core index']
  #allocation1 [shape = 'u32[144,128]{1,0:T(1,128)}', space=vmem, size = 0x12000, scoped, tag = 'internal scratch']
  %s0 = inlined_call_operand.vmem [shape: f32[2,16,128], index: 0, kind: input, shape index: {}]
  %s1 = inlined_call_operand.hbm [shape: f32[9,256], index: 1, kind: input, shape index: {}]
  %s2 = inlined_call_operand.hbm [shape: f32[9,256], index: 2, kind: input, shape index: {}]
  %s3 = inlined_call_operand.hbm [shape: f32[1,256], index: 3, kind: input, shape index: {}]
  %s4 = inlined_call_operand.vmem [shape: f32[4,16], index: 4, kind: input, shape index: {}]
  %s5 = inlined_call_operand.vmem [shape: f32[4,2], index: 5, kind: input, shape index: {}]
  %s6 = inlined_call_operand.vmem [shape: f32[4,9], index: 6, kind: input, shape index: {}]
  %s7 = inlined_call_operand.vmem [shape: f32[4,36], index: 7, kind: input, shape index: {}]
  %s8 = inlined_call_operand.vmem [shape: f32[4,2], index: 8, kind: input, shape index: {}]
  %s9 = inlined_call_operand.vmem [shape: f32[4,36], index: 9, kind: input, shape index: {}]
  %s10 = inlined_call_operand.vmem [shape: f32[4,2], index: 10, kind: input, shape index: {}]
  %s11 = inlined_call_operand.vmem [shape: f32[16,4], index: 11, kind: input, shape index: {}]
  %s12 = inlined_call_operand.vmem [shape: f32[16,2], index: 12, kind: input, shape index: {}]
  %s13 = inlined_call_operand.hbm [shape: f32[2,16,128], index: 13, kind: output, shape index: {}]
  %s14 = sld [smem:[#allocation0]]
  $region97: #{tpu_custom_call.1} parent=0
    _
  %s16 = ssub.s32 1, %s14
  %s17 = scalar_select 0, %s16, %s14
  $region1: #{tpu_custom_call.1} parent=0
    #allocation2 [shape = 'u8[16384]{0}', space=vmem, size = 0x4000, scoped, tag = 'input window, operand 1, single buffered']
    #allocation3 [shape = 's32[2]{0}', space=sflag, size = 0x8, scoped, tag = 'scoped memory for tpu_custom_call.1']
    #allocation4 [shape = 's32[2]{0}', space=sflag, size = 0x8, scoped, tag = 'scoped memory for tpu_custom_call.1']
    #allocation5 [shape = 'u8[16384]{0}', space=vmem, size = 0x4000, scoped, tag = 'input window, operand 2, single buffered']
    #allocation6 [shape = 's32[1]{0}', space=sflag, size = 0x4, scoped, tag = 'scoped memory for tpu_custom_call.1']
    #allocation7 [shape = 'u8[1024]{0}', space=vmem, size = 0x400, scoped, tag = 'input window, operand 3, single buffered']
    #allocation8 [shape = 'u8[16384]{0}', space=vmem, size = 0x4000, scoped, tag = 'output window, operand 0']
    %18 = vsyncpa [#allocation3], 0
    %19 = vsyncpa [#allocation6], 0
    %20 = vsyncpa [#allocation4], 0
    %s21 = scalar_lea.sflag [#allocation4], 1
    %22 = vsyncpa %s21, 0
    loop: start=0, step=1, limit=4
    $region2: #{tpu_custom_call.1} parent=1 // loop_pre_header
      _
    $region3: #{tpu_custom_call.1} parent=1 // loop_header
      %s24 = sphi 0, %s28
      %p25 = scmp.ge.s32.totalorder %s24, 4
      %s34 = sphi 0, %s36
      %s37 = sphi 0, %s34
      %s38 = sphi 0, %s37
      %s54 = sphi 0, %s38
      %s58 = sphi 0, %s58
      %s60 = sphi 0, %s58
      %s61 = sphi 0, %s60
      %s75 = sphi 0, %s61
      %s79 = sphi 0, %s79
      %s81 = sphi 0, %s79
      %s82 = sphi 0, %s81
      %s96 = sphi 0, %s82
      %s100 = sphi 0, %s100
      %s102 = sphi 0, %s100
      %s103 = sphi 0, %s102
      %s117 = sphi 0, %s103
      %s121 = sphi 0, %s121
      %s123 = sphi 0, %s121
      %s124 = sphi 0, %s123
      %s138 = sphi 0, %s124
      %s142 = sphi 0, %s142
      %s144 = sphi 0, %s142
      %s145 = sphi 0, %s144
      %s159 = sphi 0, %s145
      %s163 = sphi 0, %s163
      %s165 = sphi 0, %s163
      %s166 = sphi 0, %s165
      %s180 = sphi 0, %s166
      %s184 = sphi 0, %s184
      %s186 = sphi 0, %s184
      %s187 = sphi 0, %s186
      %s201 = sphi 0, %s187
      %s205 = sphi 0, %s205
      %s207 = sphi 0, %s205
      %s208 = sphi 0, %s207
      %s222 = sphi 0, %s208
      %s226 = sphi 0, %s226
      %s228 = sphi 0, %s226
      %s229 = sphi 0, %s228
      %s243 = sphi 0, %s229
      %s247 = sphi 0, %s247
      %s249 = sphi 0, %s247
      %s250 = sphi 0, %s249
      %s264 = sphi 0, %s250
      %s268 = sphi 0, %s268
      %s270 = sphi 0, %s268
      %s271 = sphi 0, %s270
      %s285 = sphi 0, %s271
      %s289 = sphi 0, %s289
      %s291 = sphi 0, %s289
      %s292 = sphi 0, %s291
      %s306 = sphi 0, %s292
      %s312 = sphi 0, %s314
      %s315 = sphi 0, %s312
      %s316 = sphi 0, %s315
      %s332 = sphi 0, %s316
    $region4: #{tpu_custom_call.1} parent=1 // loop_header_branch
      %27 = sbr.rel (%p25) target = $region8
    $region5: #{tpu_custom_call.1} parent=1 // loop_body
      %s29 = ssub.s32 %s24, 1
      %s30 = ssub.s32 %s24, 2
      %s31 = sadd.s32 %s24, 1
      %s32 = ssub.s32 %s24, %s31
      %p33 = scmp.eq.s32.totalorder %s32, 0
      %s35 = sadd.s32 %s34, 1
      %s36 = scalar_select %p33, %s34, %s35
      %p39 = pneg %p33
      %p40 = scmp.eq.s32.totalorder %s24, 1
      %p41 = por %p39, %p40
      %p42 = scmp.ne.s32.totalorder %s34, %s37
      %p43 = scmp.eq.s32.totalorder %s24, 0
      %p44 = por %p42, %p43
      %p45 = scmp.ne.s32.totalorder %s34, %s37
      %p46 = scmp.eq.s32.totalorder %s29, 1
      %p47 = por %p45, %p46
      %p48 = scmp.ne.s32.totalorder %s37, %s38
      %p49 = scmp.eq.s32.totalorder %s29, 0
      %p50 = por %p48, %p49
      %p51 = scmp.ne.s32.totalorder %s37, %s38
      %p52 = scmp.eq.s32.totalorder %s30, 1
      %p53 = por %p51, %p52
      %p55 = scmp.ne.s32.totalorder %s38, %s54
      %p56 = scmp.eq.s32.totalorder %s30, 0
      %p57 = por %p55, %p56
      %s59 = sadd.s32 %s58, 1
      %p62 = scmp.eq.s32.totalorder %s24, 1
      %p63 = scmp.ne.s32.totalorder %s58, %s60
      %p64 = scmp.eq.s32.totalorder %s24, 0
      %p65 = por %p63, %p64
      %p66 = scmp.ne.s32.totalorder %s58, %s60
      %p67 = scmp.eq.s32.totalorder %s29, 1
      %p68 = por %p66, %p67
      %p69 = scmp.ne.s32.totalorder %s60, %s61
      %p70 = scmp.eq.s32.totalorder %s29, 0
      %p71 = por %p69, %p70
      %p72 = scmp.ne.s32.totalorder %s60, %s61
      %p73 = scmp.eq.s32.totalorder %s30, 1
      %p74 = por %p72, %p73
      %p76 = scmp.ne.s32.totalorder %s61, %s75
      %p77 = scmp.eq.s32.totalorder %s30, 0
      %p78 = por %p76, %p77
      %s80 = sadd.s32 %s79, 1
      %p83 = scmp.eq.s32.totalorder %s24, 1
      %p84 = scmp.ne.s32.totalorder %s79, %s81
      %p85 = scmp.eq.s32.totalorder %s24, 0
      %p86 = por %p84, %p85
      %p87 = scmp.ne.s32.totalorder %s79, %s81
      %p88 = scmp.eq.s32.totalorder %s29, 1
      %p89 = por %p87, %p88
      %p90 = scmp.ne.s32.totalorder %s81, %s82
      %p91 = scmp.eq.s32.totalorder %s29, 0
      %p92 = por %p90, %p91
      %p93 = scmp.ne.s32.totalorder %s81, %s82
      %p94 = scmp.eq.s32.totalorder %s30, 1
      %p95 = por %p93, %p94
      %p97 = scmp.ne.s32.totalorder %s82, %s96
      %p98 = scmp.eq.s32.totalorder %s30, 0
      %p99 = por %p97, %p98
      %s101 = sadd.s32 %s100, 1
      %p104 = scmp.eq.s32.totalorder %s24, 1
      %p105 = scmp.ne.s32.totalorder %s100, %s102
      %p106 = scmp.eq.s32.totalorder %s24, 0
      %p107 = por %p105, %p106
      %p108 = scmp.ne.s32.totalorder %s100, %s102
      %p109 = scmp.eq.s32.totalorder %s29, 1
      %p110 = por %p108, %p109
      %p111 = scmp.ne.s32.totalorder %s102, %s103
      %p112 = scmp.eq.s32.totalorder %s29, 0
      %p113 = por %p111, %p112
      %p114 = scmp.ne.s32.totalorder %s102, %s103
      %p115 = scmp.eq.s32.totalorder %s30, 1
      %p116 = por %p114, %p115
      %p118 = scmp.ne.s32.totalorder %s103, %s117
      %p119 = scmp.eq.s32.totalorder %s30, 0
      %p120 = por %p118, %p119
      %s122 = sadd.s32 %s121, 1
      %p125 = scmp.eq.s32.totalorder %s24, 1
      %p126 = scmp.ne.s32.totalorder %s121, %s123
      %p127 = scmp.eq.s32.totalorder %s24, 0
      %p128 = por %p126, %p127
      %p129 = scmp.ne.s32.totalorder %s121, %s123
      %p130 = scmp.eq.s32.totalorder %s29, 1
      %p131 = por %p129, %p130
      %p132 = scmp.ne.s32.totalorder %s123, %s124
      %p133 = scmp.eq.s32.totalorder %s29, 0
      %p134 = por %p132, %p133
      %p135 = scmp.ne.s32.totalorder %s123, %s124
      %p136 = scmp.eq.s32.totalorder %s30, 1
      %p137 = por %p135, %p136
      %p139 = scmp.ne.s32.totalorder %s124, %s138
      %p140 = scmp.eq.s32.totalorder %s30, 0
      %p141 = por %p139, %p140
      %s143 = sadd.s32 %s142, 1
      %p146 = scmp.eq.s32.totalorder %s24, 1
      %p147 = scmp.ne.s32.totalorder %s142, %s144
      %p148 = scmp.eq.s32.totalorder %s24, 0
      %p149 = por %p147, %p148
      %p150 = scmp.ne.s32.totalorder %s142, %s144
      %p151 = scmp.eq.s32.totalorder %s29, 1
      %p152 = por %p150, %p151
      %p153 = scmp.ne.s32.totalorder %s144, %s145
      %p154 = scmp.eq.s32.totalorder %s29, 0
      %p155 = por %p153, %p154
      %p156 = scmp.ne.s32.totalorder %s144, %s145
      %p157 = scmp.eq.s32.totalorder %s30, 1
      %p158 = por %p156, %p157
      %p160 = scmp.ne.s32.totalorder %s145, %s159
      %p161 = scmp.eq.s32.totalorder %s30, 0
      %p162 = por %p160, %p161
      %s164 = sadd.s32 %s163, 1
      %p167 = scmp.eq.s32.totalorder %s24, 1
      %p168 = scmp.ne.s32.totalorder %s163, %s165
      %p169 = scmp.eq.s32.totalorder %s24, 0
      %p170 = por %p168, %p169
      %p171 = scmp.ne.s32.totalorder %s163, %s165
      %p172 = scmp.eq.s32.totalorder %s29, 1
      %p173 = por %p171, %p172
      %p174 = scmp.ne.s32.totalorder %s165, %s166
      %p175 = scmp.eq.s32.totalorder %s29, 0
      %p176 = por %p174, %p175
      %p177 = scmp.ne.s32.totalorder %s165, %s166
      %p178 = scmp.eq.s32.totalorder %s30, 1
      %p179 = por %p177, %p178
      %p181 = scmp.ne.s32.totalorder %s166, %s180
      %p182 = scmp.eq.s32.totalorder %s30, 0
      %p183 = por %p181, %p182
      %s185 = sadd.s32 %s184, 1
      %p188 = scmp.eq.s32.totalorder %s24, 1
      %p189 = scmp.ne.s32.totalorder %s184, %s186
      %p190 = scmp.eq.s32.totalorder %s24, 0
      %p191 = por %p189, %p190
      %p192 = scmp.ne.s32.totalorder %s184, %s186
      %p193 = scmp.eq.s32.totalorder %s29, 1
      %p194 = por %p192, %p193
      %p195 = scmp.ne.s32.totalorder %s186, %s187
      %p196 = scmp.eq.s32.totalorder %s29, 0
      %p197 = por %p195, %p196
      %p198 = scmp.ne.s32.totalorder %s186, %s187
      %p199 = scmp.eq.s32.totalorder %s30, 1
      %p200 = por %p198, %p199
      %p202 = scmp.ne.s32.totalorder %s187, %s201
      %p203 = scmp.eq.s32.totalorder %s30, 0
      %p204 = por %p202, %p203
      %s206 = sadd.s32 %s205, 1
      %p209 = scmp.eq.s32.totalorder %s24, 1
      %p210 = scmp.ne.s32.totalorder %s205, %s207
      %p211 = scmp.eq.s32.totalorder %s24, 0
      %p212 = por %p210, %p211
      %p213 = scmp.ne.s32.totalorder %s205, %s207
      %p214 = scmp.eq.s32.totalorder %s29, 1
      %p215 = por %p213, %p214
      %p216 = scmp.ne.s32.totalorder %s207, %s208
      %p217 = scmp.eq.s32.totalorder %s29, 0
      %p218 = por %p216, %p217
      %p219 = scmp.ne.s32.totalorder %s207, %s208
      %p220 = scmp.eq.s32.totalorder %s30, 1
      %p221 = por %p219, %p220
      %p223 = scmp.ne.s32.totalorder %s208, %s222
      %p224 = scmp.eq.s32.totalorder %s30, 0
      %p225 = por %p223, %p224
      %s227 = sadd.s32 %s226, 1
      %p230 = scmp.eq.s32.totalorder %s24, 1
      %p231 = scmp.ne.s32.totalorder %s226, %s228
      %p232 = scmp.eq.s32.totalorder %s24, 0
      %p233 = por %p231, %p232
      %p234 = scmp.ne.s32.totalorder %s226, %s228
      %p235 = scmp.eq.s32.totalorder %s29, 1
      %p236 = por %p234, %p235
      %p237 = scmp.ne.s32.totalorder %s228, %s229
      %p238 = scmp.eq.s32.totalorder %s29, 0
      %p239 = por %p237, %p238
      %p240 = scmp.ne.s32.totalorder %s228, %s229
      %p241 = scmp.eq.s32.totalorder %s30, 1
      %p242 = por %p240, %p241
      %p244 = scmp.ne.s32.totalorder %s229, %s243
      %p245 = scmp.eq.s32.totalorder %s30, 0
      %p246 = por %p244, %p245
      %s248 = sadd.s32 %s247, 1
      %p251 = scmp.eq.s32.totalorder %s24, 1
      %p252 = scmp.ne.s32.totalorder %s247, %s249
      %p253 = scmp.eq.s32.totalorder %s24, 0
      %p254 = por %p252, %p253
      %p255 = scmp.ne.s32.totalorder %s247, %s249
      %p256 = scmp.eq.s32.totalorder %s29, 1
      %p257 = por %p255, %p256
      %p258 = scmp.ne.s32.totalorder %s249, %s250
      %p259 = scmp.eq.s32.totalorder %s29, 0
      %p260 = por %p258, %p259
      %p261 = scmp.ne.s32.totalorder %s249, %s250
      %p262 = scmp.eq.s32.totalorder %s30, 1
      %p263 = por %p261, %p262
      %p265 = scmp.ne.s32.totalorder %s250, %s264
      %p266 = scmp.eq.s32.totalorder %s30, 0
      %p267 = por %p265, %p266
      %s269 = sadd.s32 %s268, 1
      %p272 = scmp.eq.s32.totalorder %s24, 1
      %p273 = scmp.ne.s32.totalorder %s268, %s270
      %p274 = scmp.eq.s32.totalorder %s24, 0
      %p275 = por %p273, %p274
      %p276 = scmp.ne.s32.totalorder %s268, %s270
      %p277 = scmp.eq.s32.totalorder %s29, 1
      %p278 = por %p276, %p277
      %p279 = scmp.ne.s32.totalorder %s270, %s271
      %p280 = scmp.eq.s32.totalorder %s29, 0
      %p281 = por %p279, %p280
      %p282 = scmp.ne.s32.totalorder %s270, %s271
      %p283 = scmp.eq.s32.totalorder %s30, 1
      %p284 = por %p282, %p283
      %p286 = scmp.ne.s32.totalorder %s271, %s285
      %p287 = scmp.eq.s32.totalorder %s30, 0
      %p288 = por %p286, %p287
      %s290 = sadd.s32 %s289, 1
      %p293 = scmp.eq.s32.totalorder %s24, 1
      %p294 = scmp.ne.s32.totalorder %s289, %s291
      %p295 = scmp.eq.s32.totalorder %s24, 0
      %p296 = por %p294, %p295
      %p297 = scmp.ne.s32.totalorder %s289, %s291
      %p298 = scmp.eq.s32.totalorder %s29, 1
      %p299 = por %p297, %p298
      %p300 = scmp.ne.s32.totalorder %s291, %s292
      %p301 = scmp.eq.s32.totalorder %s29, 0
      %p302 = por %p300, %p301
      %p303 = scmp.ne.s32.totalorder %s291, %s292
      %p304 = scmp.eq.s32.totalorder %s30, 1
      %p305 = por %p303, %p304
      %p307 = scmp.ne.s32.totalorder %s292, %s306
      %p308 = scmp.eq.s32.totalorder %s30, 0
      %p309 = por %p307, %p308
      %s310 = ssub.s32 %s24, %s31
      %p311 = scmp.eq.s32.totalorder %s310, 0
      %s313 = sadd.s32 %s312, 1
      %s314 = scalar_select %p311, %s312, %s313
      %p317 = pneg %p311
      %p318 = scmp.eq.s32.totalorder %s24, 1
      %p319 = por %p317, %p318
      %p320 = scmp.ne.s32.totalorder %s312, %s315
      %p321 = scmp.eq.s32.totalorder %s24, 0
      %p322 = por %p320, %p321
      %p323 = scmp.ne.s32.totalorder %s312, %s315
      %p324 = scmp.eq.s32.totalorder %s29, 1
      %p325 = por %p323, %p324
      %p326 = scmp.ne.s32.totalorder %s315, %s316
      %p327 = scmp.eq.s32.totalorder %s29, 0
      %p328 = por %p326, %p327
      %p329 = scmp.ne.s32.totalorder %s315, %s316
      %p330 = scmp.eq.s32.totalorder %s30, 1
      %p331 = por %p329, %p330
      %p333 = scmp.ne.s32.totalorder %s316, %s332
      %p334 = scmp.eq.s32.totalorder %s30, 0
      %p335 = por %p333, %p334
      %p336 = scmp.le.s32.totalorder 1, %s24
      %p337 = scmp.lt.s32.totalorder %s24, 3
      %p338 = pnand %p336, %p337
      %p339 = pneg %p338
      // Predicated region
      $region9: #{tpu_custom_call.1} parent=5 // pred_check
        _
      $region10: #{tpu_custom_call.1} parent=5 // pred_check_branch
        %341 = sbr.rel (%p338) target = $region12
      $region11: #{tpu_custom_call.1} parent=5 // pred_region
        %s342 = ssub.s32 %s24, 1
        // Predicated region
        $region13: #{tpu_custom_call.1} parent=11 // pred_check
          %p343 = pneg %p71
        $region14: #{tpu_custom_call.1} parent=11 // pred_check_branch
          %345 = sbr.rel (%p343) target = $region16
        $region15: #{tpu_custom_call.1} parent=11 // pred_region
          %s347 = ssub.s32 512, 512
          %348 = vsyncadd [#allocation3], %s347
          %s349 = sshll.u32 [#allocation2], 4
          %s350 = int_to_ptr.vmem [resolvable:$true] %s349
          %355 = dma.hbm_to_vmem [thread:$0]  %s1, 512, %s350, [#allocation3], 256, 256, 16
        $region16: #{tpu_custom_call.1} parent=11 // pred_fallthru
          _
        // Predicated region
        $region17: #{tpu_custom_call.1} parent=11 // pred_check
          %p356 = pneg %p92
        $region18: #{tpu_custom_call.1} parent=11 // pred_check_branch
          %358 = sbr.rel (%p356) target = $region20
        $region19: #{tpu_custom_call.1} parent=11 // pred_region
          %s360 = ssub.s32 512, 512
          %361 = vsyncadd [#allocation6], %s360
          %s362 = sshll.u32 [#allocation5], 4
          %s363 = int_to_ptr.vmem [resolvable:$true] %s362
          %368 = dma.hbm_to_vmem [thread:$0]  %s2, 512, %s363, [#allocation6], 256, 256, 16
        $region20: #{tpu_custom_call.1} parent=11 // pred_fallthru
          _
        // Predicated region
        $region21: #{tpu_custom_call.1} parent=11 // pred_check
          %p369 = pneg %p113
        $region22: #{tpu_custom_call.1} parent=11 // pred_check_branch
          %371 = sbr.rel (%p369) target = $region24
        $region23: #{tpu_custom_call.1} parent=11 // pred_region
          %s373 = ssub.s32 32, 32
          %374 = vsyncadd [#allocation6], %s373
          %s376 = sshll.u32 [#allocation7], 4
          %s377 = int_to_ptr.vmem [resolvable:$true] %s376
          %379 = dma.hbm_to_vmem [thread:$0]  %s3, 32, %s377, [#allocation6]
        $region24: #{tpu_custom_call.1} parent=11 // pred_fallthru
          _
        // Predicated region
        $region25: #{tpu_custom_call.1} parent=11 // pred_check
          %p380 = pneg %p134
        $region26: #{tpu_custom_call.1} parent=11 // pred_check_branch
          %382 = sbr.rel (%p380) target = $region28
        $region27: #{tpu_custom_call.1} parent=11 // pred_region
          _
        $region28: #{tpu_custom_call.1} parent=11 // pred_fallthru
          _
        // Predicated region
        $region29: #{tpu_custom_call.1} parent=11 // pred_check
          %p383 = pneg %p155
        $region30: #{tpu_custom_call.1} parent=11 // pred_check_branch
          %385 = sbr.rel (%p383) target = $region32
        $region31: #{tpu_custom_call.1} parent=11 // pred_region
          _
        $region32: #{tpu_custom_call.1} parent=11 // pred_fallthru
          _
        // Predicated region
        $region33: #{tpu_custom_call.1} parent=11 // pred_check
          %p386 = pneg %p176
        $region34: #{tpu_custom_call.1} parent=11 // pred_check_branch
          %388 = sbr.rel (%p386) target = $region36
        $region35: #{tpu_custom_call.1} parent=11 // pred_region
          _
        $region36: #{tpu_custom_call.1} parent=11 // pred_fallthru
          _
        // Predicated region
        $region37: #{tpu_custom_call.1} parent=11 // pred_check
          %p389 = pneg %p197
        $region38: #{tpu_custom_call.1} parent=11 // pred_check_branch
          %391 = sbr.rel (%p389) target = $region40
        $region39: #{tpu_custom_call.1} parent=11 // pred_region
          _
        $region40: #{tpu_custom_call.1} parent=11 // pred_fallthru
          _
        // Predicated region
        $region41: #{tpu_custom_call.1} parent=11 // pred_check
          %p392 = pneg %p218
        $region42: #{tpu_custom_call.1} parent=11 // pred_check_branch
          %394 = sbr.rel (%p392) target = $region44
        $region43: #{tpu_custom_call.1} parent=11 // pred_region
          _
        $region44: #{tpu_custom_call.1} parent=11 // pred_fallthru
          _
        // Predicated region
        $region45: #{tpu_custom_call.1} parent=11 // pred_check
          %p395 = pneg %p239
        $region46: #{tpu_custom_call.1} parent=11 // pred_check_branch
          %397 = sbr.rel (%p395) target = $region48
        $region47: #{tpu_custom_call.1} parent=11 // pred_region
          _
        $region48: #{tpu_custom_call.1} parent=11 // pred_fallthru
          _
        // Predicated region
        $region49: #{tpu_custom_call.1} parent=11 // pred_check
          %p398 = pneg %p260
        $region50: #{tpu_custom_call.1} parent=11 // pred_check_branch
          %400 = sbr.rel (%p398) target = $region52
        $region51: #{tpu_custom_call.1} parent=11 // pred_region
          _
        $region52: #{tpu_custom_call.1} parent=11 // pred_fallthru
          _
        // Predicated region
        $region53: #{tpu_custom_call.1} parent=11 // pred_check
          %p401 = pneg %p281
        $region54: #{tpu_custom_call.1} parent=11 // pred_check_branch
          %403 = sbr.rel (%p401) target = $region56
        $region55: #{tpu_custom_call.1} parent=11 // pred_region
          _
        $region56: #{tpu_custom_call.1} parent=11 // pred_fallthru
          _
        // Predicated region
        $region57: #{tpu_custom_call.1} parent=11 // pred_check
          %p404 = pneg %p302
        $region58: #{tpu_custom_call.1} parent=11 // pred_check_branch
          %406 = sbr.rel (%p404) target = $region60
        $region59: #{tpu_custom_call.1} parent=11 // pred_region
          _
        $region60: #{tpu_custom_call.1} parent=11 // pred_fallthru
          _
      $region12: #{tpu_custom_call.1} parent=5 // pred_fallthru
        _
      %p407 = scmp.lt.s32.totalorder %s24, 2
      // Predicated region
      $region61: #{tpu_custom_call.1} parent=5 // pred_check
        %p408 = pneg %p407
      $region62: #{tpu_custom_call.1} parent=5 // pred_check_branch
        %410 = sbr.rel (%p408) target = $region64
      $region63: #{tpu_custom_call.1} parent=5 // pred_region
        // Predicated region
        $region65: #{tpu_custom_call.1} parent=63 // pred_check
          %p411 = pneg %p44
        $region66: #{tpu_custom_call.1} parent=63 // pred_check_branch
          %413 = sbr.rel (%p411) target = $region68
        $region67: #{tpu_custom_call.1} parent=63 // pred_region
          %p414 = scmp.lt.s32.totalorder %s24, 1
          %s415 = scalar_select %p414, %s24, 1
          %s416 = smul.addr %s415, 2
          %s417 = smul.addr %s416, 8
          %s418 = scalar_lea.vmem %s0, %s417
        $region68: #{tpu_custom_call.1} parent=63 // pred_fallthru
          _
      $region64: #{tpu_custom_call.1} parent=5 // pred_fallthru
        _
      %p419 = scmp.le.s32.totalorder 1, %s24
      %p420 = scmp.lt.s32.totalorder %s24, 3
      %p421 = pnand %p419, %p420
      %p422 = pneg %p421
      // Predicated region
      $region69: #{tpu_custom_call.1} parent=5 // pred_check
        _
      $region70: #{tpu_custom_call.1} parent=5 // pred_check_branch
        %424 = sbr.rel (%p421) target = $region72
      $region71: #{tpu_custom_call.1} parent=5 // pred_region
        %s425 = ssub.s32 %s24, 1
        // Predicated region
        $region73: #{tpu_custom_call.1} parent=71 // pred_check
          %p426 = pneg %p71
        $region74: #{tpu_custom_call.1} parent=71 // pred_check_branch
          %428 = sbr.rel (%p426) target = $region76
        $region75: #{tpu_custom_call.1} parent=71 // pred_region
          %429 = dma.done [#allocation3], 512
        $region76: #{tpu_custom_call.1} parent=71 // pred_fallthru
          _
        // Predicated region
        $region77: #{tpu_custom_call.1} parent=71 // pred_check
          %p430 = pneg %p92
        $region78: #{tpu_custom_call.1} parent=71 // pred_check_branch
          %432 = sbr.rel (%p430) target = $region80
        $region79: #{tpu_custom_call.1} parent=71 // pred_region
          %433 = dma.done [#allocation6], 512
        $region80: #{tpu_custom_call.1} parent=71 // pred_fallthru
          _
        // Predicated region
        $region81: #{tpu_custom_call.1} parent=71 // pred_check
          %p434 = pneg %p113
        $region82: #{tpu_custom_call.1} parent=71 // pred_check_branch
          %436 = sbr.rel (%p434) target = $region84
        $region83: #{tpu_custom_call.1} parent=71 // pred_region
          %437 = dma.done [#allocation6], 32
        $region84: #{tpu_custom_call.1} parent=71 // pred_fallthru
          _
        %p438 = scmp.lt.s32.totalorder %s29, 1
        %s439 = scalar_select %p438, %s29, 1
        %s440 = smul.addr %s439, 2
        %s441 = smul.addr %s440, 8
        %s442 = scalar_lea.vmem %s0, %s441
        %p443 = pneg %p50
        %p444 = pneg %p47
        %p445 = pneg %p71
        %p446 = pneg %p68
        %p447 = pneg %p92
        %p448 = pneg %p89
        %p449 = pneg %p113
        %p450 = pneg %p110
        %p451 = pneg %p134
        %p452 = pneg %p131
        %p453 = pneg %p155
        %p454 = pneg %p152
        %p455 = pneg %p176
        %p456 = pneg %p173
        %p457 = pneg %p197
        %p458 = pneg %p194
        %p459 = pneg %p218
        %p460 = pneg %p215
        %p461 = pneg %p239
        %p462 = pneg %p236
        %p463 = pneg %p260
        %p464 = pneg %p257
        %p465 = pneg %p281
        %p466 = pneg %p278
        %p467 = pneg %p302
        %p468 = pneg %p299
        %p469 = pneg %p328
        %p470 = pneg %p325
        %s471 = sand.u32 %s315, 1
        %s472 = scalar_lea.sflag [#allocation4], %s471
        %s473 = sand.u32 %s315, 1
        %s474 = smul.addr %s473, 16
        %s475 = scalar_lea.vmem [#allocation8], %s474
        %p476 = scmp.lt.s32.totalorder %s29, 1
        %s477 = scalar_select %p476, %s29, 1
        %s478 = smul.addr %s477, 2
        %s479 = smul.addr %s478, 8
        %s480 = scalar_lea.vmem %s0, %s479
        %v481 = vld [vmem:[%s480] sm:$0xff]
        %v482 = vld [vmem:[%s480 + $0x8] sm:$0xff]
        %v483 = vld [vmem:[%s4] sm:$0xf]
        %vm484 = vcmask 130048
        %v486 = vsel %vm484, %v483, 0
        %488 = vmatprep.subr.mxu0 0.0
        %489 = vmatpush1.msra.mxu0 0.0
        %490 = vmatprep.subr.mxu0 0.0
        %491 = vmatpush1.msra.mxu0 0.0
        %492 = vmatprep.subr.mxu0 0.0
        %493 = vmatpush1.msra.mxu0 0.0
        %494 = vmatprep.subr.mxu0 0.0
        %495 = vmatpush1.msra.mxu0 0.0
        %496 = vmatprep.subr.mxu0 0.0
        %497 = vmatpush1.msra.mxu0 0.0
        %498 = vmatprep.subr.mxu0 0.0
        %499 = vmatpush1.msra.mxu0 0.0
        %500 = vmatprep.subr.mxu0 0.0
        %501 = vmatpush1.msra.mxu0 0.0
        %502 = vmatprep.subr.mxu0 0.0
        %503 = vmatpush1.msra.mxu0 0.0
        %504 = vmatprep.subr.mxu0 0.0
        %505 = vmatpush1.msra.mxu0 0.0
        %506 = vmatprep.subr.mxu0 0.0
        %507 = vmatpush1.msra.mxu0 0.0
        %508 = vmatprep.subr.mxu0 0.0
        %509 = vmatpush1.msra.mxu0 0.0
        %510 = vmatprep.subr.mxu0 0.0
        %511 = vmatpush1.msra.mxu0 0.0
        %512 = vmatprep.subr.mxu0 0.0
        %513 = vmatpush1.msra.mxu0 0.0
        %514 = vmatprep.subr.mxu0 0.0
        %515 = vmatpush1.msra.mxu0 0.0
        %516 = vmatprep.subr.mxu0 0.0
        %517 = vmatpush1.msra.mxu0 %v482
        %518 = vmatprep.subr.mxu0 0.0
        %519 = vmatpush1.msra.mxu0 %v481
        %520 = vmatprep.subr.mxu0 0.0
        %521 = vmatpush2.msra.mxu0 0.0
        %522 = vmatprep.subr.mxu0 0.0
        %523 = vmatpush2.msra.mxu0 0.0
        %524 = vmatprep.subr.mxu0 0.0
        %525 = vmatpush2.msra.mxu0 0.0
        %526 = vmatprep.subr.mxu0 0.0
        %527 = vmatpush2.msra.mxu0 0.0
        %528 = vmatprep.subr.mxu0 0.0
        %529 = vmatpush2.msra.mxu0 0.0
        %530 = vmatprep.subr.mxu0 0.0
        %531 = vmatpush2.msra.mxu0 0.0
        %532 = vmatprep.subr.mxu0 0.0
        %533 = vmatpush2.msra.mxu0 0.0
        %534 = vmatprep.subr.mxu0 0.0
        %535 = vmatpush2.msra.mxu0 0.0
        %536 = vmatprep.subr.mxu0 0.0
        %537 = vmatpush2.msra.mxu0 0.0
        %538 = vmatprep.subr.mxu0 0.0
        %539 = vmatpush2.msra.mxu0 0.0
        %540 = vmatprep.subr.mxu0 0.0
        %541 = vmatpush2.msra.mxu0 0.0
        %542 = vmatprep.subr.mxu0 0.0
        %543 = vmatpush2.msra.mxu0 0.0
        %544 = vmatprep.subr.mxu0 0.0
        %545 = vmatpush2.msra.mxu0 0.0
        %546 = vmatprep.subr.mxu0 0.0
        %547 = vmatpush2.msra.mxu0 0.0
        %548 = vmatprep.subr.mxu0 0.0
        %549 = vmatpush2.msra.mxu0 0.0
        %550 = vmatprep.subr.mxu0 0.0
        %551 = vmatpush2.msra.mxu0 0.0
        %552 = vmatprep.mubr.f32.mxu0 0.0
        %553 = vmatmul.mubr.f32.gmra.mxu0 %v486
        %v554 = vpop.f32.mrf.mxu0
        %v555 = vadd.f32 0.0, %v554
        %v556 = vpop.f32.mrf.mxu0
        %557 = vdwg.mxu0
        %v558 = vld [vmem:[%s5] sm:$0xf]
        %560 = vset.pattern.permute.xlu0 0
        %561 = vperm.xlu0 %560, %v558
        %v562 = vpop.permute.xlu0 %561
        %v564 = vmul.f32 %v555, %v562
        %565 = vset.pattern.permute.xlu0 1
        %566 = vperm.xlu0 %565, %v558
        %v567 = vpop.permute.xlu0 %566
        %v569 = vadd.f32 %v564, %v567
        %v570 = vld [vmem:[%s6] sm:$0xf]
        %571 = vrot.lane.b32.xlu0 %v569, 5
        %v572 = vpop.permute.xlu0 %571
        %574 = vset.pattern.permute.xlu0 0
        %575 = vperm.xlu0 %574, %v570
        %v576 = vpop.permute.xlu0 %575
        %v578 = vmul.f32 %v576, %v572
        %v579 = vld [vmem:[#allocation2] ss:$0 sm:$0xff]
        %v580 = vmul.f32 %v578, %v579
        %v581 = vadd.f32 %v580, 0.0
        %582 = vrot.lane.b32.xlu0 %v569, 4
        %v583 = vpop.permute.xlu0 %582
        %584 = vset.pattern.permute.xlu0 1
        %585 = vperm.xlu0 %584, %v570
        %v586 = vpop.permute.xlu0 %585
        %v588 = vmul.f32 %v586, %v583
        %v589 = vld [vmem:[#allocation2 + $0x1] ss:$0 sm:$0xff]
        %v590 = vmul.f32 %v588, %v589
        %v591 = vadd.f32 %v581, %v590
        %592 = vrot.lane.b32.xlu0 %v569, 3
        %v593 = vpop.permute.xlu0 %592
        %594 = vset.pattern.permute.xlu0 2
        %595 = vperm.xlu0 %594, %v570
        %v596 = vpop.permute.xlu0 %595
        %v598 = vmul.f32 %v596, %v593
        %v599 = vld [vmem:[#allocation2 + $0x2] ss:$0 sm:$0xff]
        %v600 = vmul.f32 %v598, %v599
        %v601 = vadd.f32 %v591, %v600
        %602 = vrot.lane.b32.xlu0 %v569, 1
        %v603 = vpop.permute.xlu0 %602
        %604 = vset.pattern.permute.xlu0 3
        %605 = vperm.xlu0 %604, %v570
        %v606 = vpop.permute.xlu0 %605
        %v608 = vmul.f32 %v606, %v603
        %v609 = vld [vmem:[#allocation2 + $0x3] ss:$0 sm:$0xff]
        %v610 = vmul.f32 %v608, %v609
        %v611 = vadd.f32 %v601, %v610
        %612 = vset.pattern.permute.xlu0 4
        %613 = vperm.xlu0 %612, %v570
        %v614 = vpop.permute.xlu0 %613
        %v616 = vmul.f32 %v614, %v569
        %v617 = vld [vmem:[#allocation2 + $0x4] ss:$0 sm:$0xff]
        %v618 = vmul.f32 %v616, %v617
        %v619 = vadd.f32 %v611, %v618
        %620 = vrot.lane.b32.xlu0 %v569, 127
        %v621 = vpop.permute.xlu0 %620
        %622 = vset.pattern.permute.xlu0 5
        %623 = vperm.xlu0 %622, %v570
        %v624 = vpop.permute.xlu0 %623
        %v626 = vmul.f32 %v624, %v621
        %v627 = vld [vmem:[#allocation2 + $0x5] ss:$0 sm:$0xff]
        %v628 = vmul.f32 %v626, %v627
        %v629 = vadd.f32 %v619, %v628
        %630 = vrot.lane.b32.xlu0 %v569, 125
        %v631 = vpop.permute.xlu0 %630
        %632 = vset.pattern.permute.xlu0 6
        %633 = vperm.xlu0 %632, %v570
        %v634 = vpop.permute.xlu0 %633
        %v636 = vmul.f32 %v634, %v631
        %v637 = vld [vmem:[#allocation2 + $0x6] ss:$0 sm:$0xff]
        %v638 = vmul.f32 %v636, %v637
        %v639 = vadd.f32 %v629, %v638
        %640 = vrot.lane.b32.xlu0 %v569, 124
        %v641 = vpop.permute.xlu0 %640
        %642 = vset.pattern.permute.xlu0 7
        %643 = vperm.xlu0 %642, %v570
        %v644 = vpop.permute.xlu0 %643
        %v646 = vmul.f32 %v644, %v641
        %v647 = vld [vmem:[#allocation2 + $0x7] ss:$0 sm:$0xff]
        %v648 = vmul.f32 %v646, %v647
        %v649 = vadd.f32 %v639, %v648
        %650 = vrot.lane.b32.xlu0 %v569, 123
        %v651 = vpop.permute.xlu0 %650
        %652 = vset.pattern.permute.xlu0 8
        %653 = vperm.xlu0 %652, %v570
        %v654 = vpop.permute.xlu0 %653
        %v656 = vmul.f32 %v654, %v651
        %v657 = vld [vmem:[#allocation2 + $0x10] ss:$0 sm:$0xff]
        %v658 = vmul.f32 %v656, %v657
        %v659 = vadd.f32 %v649, %v658
        %660 = vrot.lane.b32.xlu0 %v659, 112
        %v661 = vpop.permute.xlu0 %660
        %v662 = vsub.f32 %v661, %v569
        %663 = vrot.lane.b32.xlu0 %v659, 16
        %v664 = vpop.permute.xlu0 %663
        %v665 = vsub.f32 %v664, %v569
        %v666 = vld [vmem:[#allocation7] sm:$0x3]
        %v668 = vlaneseq
        %v669 = vshrl.u32 %v668, 7
        %v670 = vsub.s32 0, %v669
        %v671 = vrot.slane %v666, %v670
        %v672 = vlaneseq
        %v673 = vshrl.u32 %v672, 7
        %v674 = vsub.s32 1, %v673
        %v675 = vrot.slane %v666, %v674
        %v678 = vmul.f32 %v662, %v671
        %v679 = vmul.f32 %v665, %v675
        %680 = vrot.lane.b32.xlu0 %v678, 5
        %v681 = vpop.permute.xlu0 %680
        %682 = vrot.lane.b32.xlu0 %v679, 5
        %v683 = vpop.permute.xlu0 %682
        %v684 = vlaneseq
        %v685 = vand.u32 %v684, 127
        %vm686 = vcmp.lt.s32.totalorder %v685, 5
        %v687 = vsel %vm686, %v681, %v683
        %v688 = vsel %vm686, %v683, %v681
        %v689 = vld [vmem:[#allocation2] ss:$8 sm:$0x3]
        %v691 = vlaneseq
        %v692 = vshrl.u32 %v691, 7
        %v693 = vsub.s32 0, %v692
        %v694 = vrot.slane %v689, %v693
        %v695 = vlaneseq
        %v696 = vshrl.u32 %v695, 7
        %v697 = vsub.s32 1, %v696
        %v698 = vrot.slane %v689, %v697
        %v701 = vmul.f32 %v688, %v694
        %v702 = vmul.f32 %v687, %v698
        %703 = vrot.lane.b32.xlu0 %v678, 4
        %v704 = vpop.permute.xlu0 %703
        %705 = vrot.lane.b32.xlu0 %v679, 4
        %v706 = vpop.permute.xlu0 %705
        %vm707 = vcmp.lt.s32.totalorder %v685, 4
        %v708 = vsel %vm707, %v704, %v706
        %v709 = vsel %vm707, %v706, %v704
        %s710 = scalar_lea.vmem [#allocation2], 1
        %v711 = vld [vmem:[%s710] ss:$8 sm:$0x3]
        %v713 = vlaneseq
        %v714 = vshrl.u32 %v713, 7
        %v715 = vsub.s32 0, %v714
        %v716 = vrot.slane %v711, %v715
        %v717 = vlaneseq
        %v718 = vshrl.u32 %v717, 7
        %v719 = vsub.s32 1, %v718
        %v720 = vrot.slane %v711, %v719
        %v723 = vmul.f32 %v709, %v716
        %v724 = vmul.f32 %v708, %v720
        %725 = vrot.lane.b32.xlu0 %v678, 3
        %v726 = vpop.permute.xlu0 %725
        %727 = vrot.lane.b32.xlu0 %v679, 3
        %v728 = vpop.permute.xlu0 %727
        %vm729 = vcmp.lt.s32.totalorder %v685, 3
        %v730 = vsel %vm729, %v726, %v728
        %v731 = vsel %vm729, %v728, %v726
        %s732 = scalar_lea.vmem [#allocation2], 2
        %v733 = vld [vmem:[%s732] ss:$8 sm:$0x3]
        %v735 = vlaneseq
        %v736 = vshrl.u32 %v735, 7
        %v737 = vsub.s32 0, %v736
        %v738 = vrot.slane %v733, %v737
        %v739 = vlaneseq
        %v740 = vshrl.u32 %v739, 7
        %v741 = vsub.s32 1, %v740
        %v742 = vrot.slane %v733, %v741
        %v745 = vmul.f32 %v731, %v738
        %v746 = vmul.f32 %v730, %v742
        %747 = vrot.lane.b32.xlu0 %v678, 1
        %v748 = vpop.permute.xlu0 %747
        %749 = vrot.lane.b32.xlu0 %v679, 1
        %v750 = vpop.permute.xlu0 %749
        %vm751 = vcmp.lt.s32.totalorder %v685, 1
        %v752 = vsel %vm751, %v748, %v750
        %v753 = vsel %vm751, %v750, %v748
        %s754 = scalar_lea.vmem [#allocation2], 3
        %v755 = vld [vmem:[%s754] ss:$8 sm:$0x3]
        %v757 = vlaneseq
        %v758 = vshrl.u32 %v757, 7
        %v759 = vsub.s32 0, %v758
        %v760 = vrot.slane %v755, %v759
        %v761 = vlaneseq
        %v762 = vshrl.u32 %v761, 7
        %v763 = vsub.s32 1, %v762
        %v764 = vrot.slane %v755, %v763
        %v767 = vmul.f32 %v753, %v760
        %v768 = vmul.f32 %v752, %v764
        %s769 = scalar_lea.vmem [#allocation2], 4
        %v770 = vld [vmem:[%s769] ss:$8 sm:$0x3]
        %v772 = vlaneseq
        %v773 = vshrl.u32 %v772, 7
        %v774 = vsub.s32 0, %v773
        %v775 = vrot.slane %v770, %v774
        %v776 = vlaneseq
        %v777 = vshrl.u32 %v776, 7
        %v778 = vsub.s32 1, %v777
        %v779 = vrot.slane %v770, %v778
        %v782 = vmul.f32 %v678, %v775
        %v783 = vmul.f32 %v679, %v779
        %784 = vrot.lane.b32.xlu0 %v678, 127
        %v785 = vpop.permute.xlu0 %784
        %786 = vrot.lane.b32.xlu0 %v679, 127
        %v787 = vpop.permute.xlu0 %786
        %vm788 = vcmp.lt.s32.totalorder %v685, 127
        %v789 = vsel %vm788, %v785, %v787
        %v790 = vsel %vm788, %v787, %v785
        %s791 = scalar_lea.vmem [#allocation2], 5
        %v792 = vld [vmem:[%s791] ss:$8 sm:$0x3]
        %v794 = vlaneseq
        %v795 = vshrl.u32 %v794, 7
        %v796 = vsub.s32 0, %v795
        %v797 = vrot.slane %v792, %v796
        %v798 = vlaneseq
        %v799 = vshrl.u32 %v798, 7
        %v800 = vsub.s32 1, %v799
        %v801 = vrot.slane %v792, %v800
        %v804 = vmul.f32 %v789, %v797
        %v805 = vmul.f32 %v790, %v801
        %806 = vrot.lane.b32.xlu0 %v678, 125
        %v807 = vpop.permute.xlu0 %806
        %808 = vrot.lane.b32.xlu0 %v679, 125
        %v809 = vpop.permute.xlu0 %808
        %vm810 = vcmp.lt.s32.totalorder %v685, 125
        %v811 = vsel %vm810, %v807, %v809
        %v812 = vsel %vm810, %v809, %v807
        %s813 = scalar_lea.vmem [#allocation2], 6
        %v814 = vld [vmem:[%s813] ss:$8 sm:$0x3]
        %v816 = vlaneseq
        %v817 = vshrl.u32 %v816, 7
        %v818 = vsub.s32 0, %v817
        %v819 = vrot.slane %v814, %v818
        %v820 = vlaneseq
        %v821 = vshrl.u32 %v820, 7
        %v822 = vsub.s32 1, %v821
        %v823 = vrot.slane %v814, %v822
        %v826 = vmul.f32 %v811, %v819
        %v827 = vmul.f32 %v812, %v823
        %828 = vrot.lane.b32.xlu0 %v678, 124
        %v829 = vpop.permute.xlu0 %828
        %830 = vrot.lane.b32.xlu0 %v679, 124
        %v831 = vpop.permute.xlu0 %830
        %vm832 = vcmp.lt.s32.totalorder %v685, 124
        %v833 = vsel %vm832, %v829, %v831
        %v834 = vsel %vm832, %v831, %v829
        %s835 = scalar_lea.vmem [#allocation2], 7
        %v836 = vld [vmem:[%s835] ss:$8 sm:$0x3]
        %v838 = vlaneseq
        %v839 = vshrl.u32 %v838, 7
        %v840 = vsub.s32 0, %v839
        %v841 = vrot.slane %v836, %v840
        %v842 = vlaneseq
        %v843 = vshrl.u32 %v842, 7
        %v844 = vsub.s32 1, %v843
        %v845 = vrot.slane %v836, %v844
        %v848 = vmul.f32 %v833, %v841
        %v849 = vmul.f32 %v834, %v845
        %850 = vrot.lane.b32.xlu0 %v678, 123
        %v851 = vpop.permute.xlu0 %850
        %852 = vrot.lane.b32.xlu0 %v679, 123
        %v853 = vpop.permute.xlu0 %852
        %vm854 = vcmp.lt.s32.totalorder %v685, 123
        %v855 = vsel %vm854, %v851, %v853
        %v856 = vsel %vm854, %v853, %v851
        %s857 = scalar_lea.vmem [#allocation2], 16
        %v858 = vld [vmem:[%s857] ss:$8 sm:$0x3]
        %v860 = vlaneseq
        %v861 = vshrl.u32 %v860, 7
        %v862 = vsub.s32 0, %v861
        %v863 = vrot.slane %v858, %v862
        %v864 = vlaneseq
        %v865 = vshrl.u32 %v864, 7
        %v866 = vsub.s32 1, %v865
        %v867 = vrot.slane %v858, %v866
        %v870 = vmul.f32 %v855, %v863
        %v871 = vmul.f32 %v856, %v867
        %v874 = vrot.slane %v723, 4
        %v875 = vrot.slane %v724, 4
        %v880 = vrot.slane %v767, 4
        %v881 = vrot.slane %v768, 4
        %v886 = vrot.slane %v804, 4
        %v887 = vrot.slane %v805, 4
        %v892 = vrot.slane %v848, 4
        %v893 = vrot.slane %v849, 4
        %vm896 = vcmask 1043456
        %v897 = vsel %vm896, %v701, %v874
        %v898 = vsel %vm896, %v702, %v875
        %v899 = vsel %vm896, %v745, %v880
        %v900 = vsel %vm896, %v746, %v881
        %v901 = vsel %vm896, %v782, %v886
        %v902 = vsel %vm896, %v783, %v887
        %v903 = vsel %vm896, %v826, %v892
        %v904 = vsel %vm896, %v827, %v893
        %v905 = vld [vmem:[%s9] sm:$0xf]
        %vm906 = vcmask 293888
        %v908 = vsel %vm906, %v905, 0
        %v911 = vsel %vm896, %v870, 0
        %v914 = vsel %vm896, %v871, 0
        %916 = vmatprep.subr.mxu0 0.0
        %917 = vmatpush1.msra.mxu0 0.0
        %918 = vmatprep.subr.mxu0 0.0
        %919 = vmatpush1.msra.mxu0 0.0
        %920 = vmatprep.subr.mxu0 0.0
        %921 = vmatpush1.msra.mxu0 0.0
        %922 = vmatprep.subr.mxu0 0.0
        %923 = vmatpush1.msra.mxu0 0.0
        %924 = vmatprep.subr.mxu0 0.0
        %925 = vmatpush1.msra.mxu0 0.0
        %926 = vmatprep.subr.mxu0 0.0
        %927 = vmatpush1.msra.mxu0 0.0
        %928 = vmatprep.subr.mxu0 0.0
        %929 = vmatpush1.msra.mxu0 0.0
        %930 = vmatprep.subr.mxu0 0.0
        %931 = vmatpush1.msra.mxu0 0.0
        %932 = vmatprep.subr.mxu0 0.0
        %933 = vmatpush1.msra.mxu0 0.0
        %934 = vmatprep.subr.mxu0 0.0
        %935 = vmatpush1.msra.mxu0 0.0
        %936 = vmatprep.subr.mxu0 0.0
        %937 = vmatpush1.msra.mxu0 0.0
        %938 = vmatprep.subr.mxu0 %v914
        %939 = vmatpush1.msra.mxu0 %v911
        %940 = vmatprep.subr.mxu0 %v904
        %941 = vmatpush1.msra.mxu0 %v903
        %942 = vmatprep.subr.mxu0 %v902
        %943 = vmatpush1.msra.mxu0 %v901
        %944 = vmatprep.subr.mxu0 %v900
        %945 = vmatpush1.msra.mxu0 %v899
        %946 = vmatprep.subr.mxu0 %v898
        %947 = vmatpush1.msra.mxu0 %v897
        %948 = vmatprep.subr.mxu0 0.0
        %949 = vmatpush2.msra.mxu0 0.0
        %950 = vmatprep.subr.mxu0 0.0
        %951 = vmatpush2.msra.mxu0 0.0
        %952 = vmatprep.subr.mxu0 0.0
        %953 = vmatpush2.msra.mxu0 0.0
        %954 = vmatprep.subr.mxu0 0.0
        %955 = vmatpush2.msra.mxu0 0.0
        %956 = vmatprep.subr.mxu0 0.0
        %957 = vmatpush2.msra.mxu0 0.0
        %958 = vmatprep.subr.mxu0 0.0
        %959 = vmatpush2.msra.mxu0 0.0
        %960 = vmatprep.subr.mxu0 0.0
        %961 = vmatpush2.msra.mxu0 0.0
        %962 = vmatprep.subr.mxu0 0.0
        %963 = vmatpush2.msra.mxu0 0.0
        %964 = vmatprep.subr.mxu0 0.0
        %965 = vmatpush2.msra.mxu0 0.0
        %966 = vmatprep.subr.mxu0 0.0
        %967 = vmatpush2.msra.mxu0 0.0
        %968 = vmatprep.subr.mxu0 0.0
        %969 = vmatpush2.msra.mxu0 0.0
        %970 = vmatprep.subr.mxu0 0.0
        %971 = vmatpush2.msra.mxu0 0.0
        %972 = vmatprep.subr.mxu0 0.0
        %973 = vmatpush2.msra.mxu0 0.0
        %974 = vmatprep.subr.mxu0 0.0
        %975 = vmatpush2.msra.mxu0 0.0
        %976 = vmatprep.subr.mxu0 0.0
        %977 = vmatpush2.msra.mxu0 0.0
        %978 = vmatprep.subr.mxu0 0.0
        %979 = vmatpush2.msra.mxu0 0.0
        %980 = vmatprep.mubr.f32.mxu0 0.0
        %981 = vmatmul.mubr.f32.gmra.mxu0 %v908
        %v982 = vpop.f32.mrf.mxu0
        %v983 = vadd.f32 0.0, %v982
        %v984 = vpop.f32.mrf.mxu0
        %v985 = vadd.f32 0.0, %v984
        %986 = vdwg.mxu0
        %v987 = vld [vmem:[%s10] sm:$0xf]
        %989 = vset.pattern.permute.xlu0 0
        %990 = vperm.xlu0 %989, %v987
        %v991 = vpop.permute.xlu0 %990
        %v993 = vmul.f32 %v983, %v991
        %v994 = vmul.f32 %v985, %v991
        %995 = vset.pattern.permute.xlu0 1
        %996 = vperm.xlu0 %995, %v987
        %v997 = vpop.permute.xlu0 %996
        %v999 = vadd.f32 %v993, %v997
        %v1000 = vadd.f32 %v994, %v997
        %v1001 = vadd.f32 %v678, %v789
        %v1002 = vadd.f32 %v679, %v790
        %v1003 = vadd.f32 %v1001, %v833
        %v1004 = vadd.f32 %v1002, %v834
        %v1005 = vadd.f32 %v1003, %v855
        %v1006 = vadd.f32 %v1004, %v856
        %v1007 = vmul.f32 %v1005, 0.25
        %v1008 = vmul.f32 %v1006, 0.25
        %1009 = vrot.lane.b32.xlu0 %v1007, 10
        %v1010 = vpop.permute.xlu0 %1009
        %1011 = vrot.lane.b32.xlu0 %v1008, 10
        %v1012 = vpop.permute.xlu0 %1011
        %vm1013 = vcmp.lt.s32.totalorder %v685, 10
        %v1014 = vsel %vm1013, %v1010, %v1012
        %v1015 = vsel %vm1013, %v1012, %v1010
        %v1016 = vld [vmem:[#allocation5] ss:$8 sm:$0x3]
        %v1018 = vlaneseq
        %v1019 = vshrl.u32 %v1018, 7
        %v1020 = vsub.s32 0, %v1019
        %v1021 = vrot.slane %v1016, %v1020
        %v1022 = vlaneseq
        %v1023 = vshrl.u32 %v1022, 7
        %v1024 = vsub.s32 1, %v1023
        %v1025 = vrot.slane %v1016, %v1024
        %v1028 = vmul.f32 %v1015, %v1021
        %v1029 = vmul.f32 %v1014, %v1025
        %1030 = vrot.lane.b32.xlu0 %v1007, 8
        %v1031 = vpop.permute.xlu0 %1030
        %1032 = vrot.lane.b32.xlu0 %v1008, 8
        %v1033 = vpop.permute.xlu0 %1032
        %vm1034 = vcmp.lt.s32.totalorder %v685, 8
        %v1035 = vsel %vm1034, %v1031, %v1033
        %v1036 = vsel %vm1034, %v1033, %v1031
        %s1037 = scalar_lea.vmem [#allocation5], 1
        %v1038 = vld [vmem:[%s1037] ss:$8 sm:$0x3]
        %v1040 = vlaneseq
        %v1041 = vshrl.u32 %v1040, 7
        %v1042 = vsub.s32 0, %v1041
        %v1043 = vrot.slane %v1038, %v1042
        %v1044 = vlaneseq
        %v1045 = vshrl.u32 %v1044, 7
        %v1046 = vsub.s32 1, %v1045
        %v1047 = vrot.slane %v1038, %v1046
        %v1050 = vmul.f32 %v1036, %v1043
        %v1051 = vmul.f32 %v1035, %v1047
        %1052 = vrot.lane.b32.xlu0 %v1007, 6
        %v1053 = vpop.permute.xlu0 %1052
        %1054 = vrot.lane.b32.xlu0 %v1008, 6
        %v1055 = vpop.permute.xlu0 %1054
        %vm1056 = vcmp.lt.s32.totalorder %v685, 6
        %v1057 = vsel %vm1056, %v1053, %v1055
        %v1058 = vsel %vm1056, %v1055, %v1053
        %s1059 = scalar_lea.vmem [#allocation5], 2
        %v1060 = vld [vmem:[%s1059] ss:$8 sm:$0x3]
        %v1062 = vlaneseq
        %v1063 = vshrl.u32 %v1062, 7
        %v1064 = vsub.s32 0, %v1063
        %v1065 = vrot.slane %v1060, %v1064
        %v1066 = vlaneseq
        %v1067 = vshrl.u32 %v1066, 7
        %v1068 = vsub.s32 1, %v1067
        %v1069 = vrot.slane %v1060, %v1068
        %v1072 = vmul.f32 %v1058, %v1065
        %v1073 = vmul.f32 %v1057, %v1069
        %1074 = vrot.lane.b32.xlu0 %v1007, 2
        %v1075 = vpop.permute.xlu0 %1074
        %1076 = vrot.lane.b32.xlu0 %v1008, 2
        %v1077 = vpop.permute.xlu0 %1076
        %vm1078 = vcmp.lt.s32.totalorder %v685, 2
        %v1079 = vsel %vm1078, %v1075, %v1077
        %v1080 = vsel %vm1078, %v1077, %v1075
        %s1081 = scalar_lea.vmem [#allocation5], 3
        %v1082 = vld [vmem:[%s1081] ss:$8 sm:$0x3]
        %v1084 = vlaneseq
        %v1085 = vshrl.u32 %v1084, 7
        %v1086 = vsub.s32 0, %v1085
        %v1087 = vrot.slane %v1082, %v1086
        %v1088 = vlaneseq
        %v1089 = vshrl.u32 %v1088, 7
        %v1090 = vsub.s32 1, %v1089
        %v1091 = vrot.slane %v1082, %v1090
        %v1094 = vmul.f32 %v1080, %v1087
        %v1095 = vmul.f32 %v1079, %v1091
        %s1096 = scalar_lea.vmem [#allocation5], 4
        %v1097 = vld [vmem:[%s1096] ss:$8 sm:$0x3]
        %v1099 = vlaneseq
        %v1100 = vshrl.u32 %v1099, 7
        %v1101 = vsub.s32 0, %v1100
        %v1102 = vrot.slane %v1097, %v1101
        %v1103 = vlaneseq
        %v1104 = vshrl.u32 %v1103, 7
        %v1105 = vsub.s32 1, %v1104
        %v1106 = vrot.slane %v1097, %v1105
        %v1109 = vmul.f32 %v1007, %v1102
        %v1110 = vmul.f32 %v1008, %v1106
        %1111 = vrot.lane.b32.xlu0 %v1007, 126
        %v1112 = vpop.permute.xlu0 %1111
        %1113 = vrot.lane.b32.xlu0 %v1008, 126
        %v1114 = vpop.permute.xlu0 %1113
        %vm1115 = vcmp.lt.s32.totalorder %v685, 126
        %v1116 = vsel %vm1115, %v1112, %v1114
        %v1117 = vsel %vm1115, %v1114, %v1112
        %s1118 = scalar_lea.vmem [#allocation5], 5
        %v1119 = vld [vmem:[%s1118] ss:$8 sm:$0x3]
        %v1121 = vlaneseq
        %v1122 = vshrl.u32 %v1121, 7
        %v1123 = vsub.s32 0, %v1122
        %v1124 = vrot.slane %v1119, %v1123
        %v1125 = vlaneseq
        %v1126 = vshrl.u32 %v1125, 7
        %v1127 = vsub.s32 1, %v1126
        %v1128 = vrot.slane %v1119, %v1127
        %v1131 = vmul.f32 %v1116, %v1124
        %v1132 = vmul.f32 %v1117, %v1128
        %1133 = vrot.lane.b32.xlu0 %v1007, 122
        %v1134 = vpop.permute.xlu0 %1133
        %1135 = vrot.lane.b32.xlu0 %v1008, 122
        %v1136 = vpop.permute.xlu0 %1135
        %vm1137 = vcmp.lt.s32.totalorder %v685, 122
        %v1138 = vsel %vm1137, %v1134, %v1136
        %v1139 = vsel %vm1137, %v1136, %v1134
        %s1140 = scalar_lea.vmem [#allocation5], 6
        %v1141 = vld [vmem:[%s1140] ss:$8 sm:$0x3]
        %v1143 = vlaneseq
        %v1144 = vshrl.u32 %v1143, 7
        %v1145 = vsub.s32 0, %v1144
        %v1146 = vrot.slane %v1141, %v1145
        %v1147 = vlaneseq
        %v1148 = vshrl.u32 %v1147, 7
        %v1149 = vsub.s32 1, %v1148
        %v1150 = vrot.slane %v1141, %v1149
        %v1153 = vmul.f32 %v1138, %v1146
        %v1154 = vmul.f32 %v1139, %v1150
        %1155 = vrot.lane.b32.xlu0 %v1007, 120
        %v1156 = vpop.permute.xlu0 %1155
        %1157 = vrot.lane.b32.xlu0 %v1008, 120
        %v1158 = vpop.permute.xlu0 %1157
        %vm1159 = vcmp.lt.s32.totalorder %v685, 120
        %v1160 = vsel %vm1159, %v1156, %v1158
        %v1161 = vsel %vm1159, %v1158, %v1156
        %s1162 = scalar_lea.vmem [#allocation5], 7
        %v1163 = vld [vmem:[%s1162] ss:$8 sm:$0x3]
        %v1165 = vlaneseq
        %v1166 = vshrl.u32 %v1165, 7
        %v1167 = vsub.s32 0, %v1166
        %v1168 = vrot.slane %v1163, %v1167
        %v1169 = vlaneseq
        %v1170 = vshrl.u32 %v1169, 7
        %v1171 = vsub.s32 1, %v1170
        %v1172 = vrot.slane %v1163, %v1171
        %v1175 = vmul.f32 %v1160, %v1168
        %v1176 = vmul.f32 %v1161, %v1172
        %1177 = vrot.lane.b32.xlu0 %v1007, 118
        %v1178 = vpop.permute.xlu0 %1177
        %1179 = vrot.lane.b32.xlu0 %v1008, 118
        %v1180 = vpop.permute.xlu0 %1179
        %vm1181 = vcmp.lt.s32.totalorder %v685, 118
        %v1182 = vsel %vm1181, %v1178, %v1180
        %v1183 = vsel %vm1181, %v1180, %v1178
        %s1184 = scalar_lea.vmem [#allocation5], 16
        %v1185 = vld [vmem:[%s1184] ss:$8 sm:$0x3]
        %v1187 = vlaneseq
        %v1188 = vshrl.u32 %v1187, 7
        %v1189 = vsub.s32 0, %v1188
        %v1190 = vrot.slane %v1185, %v1189
        %v1191 = vlaneseq
        %v1192 = vshrl.u32 %v1191, 7
        %v1193 = vsub.s32 1, %v1192
        %v1194 = vrot.slane %v1185, %v1193
        %v1197 = vmul.f32 %v1182, %v1190
        %v1198 = vmul.f32 %v1183, %v1194
        %v1201 = vrot.slane %v1050, 4
        %v1202 = vrot.slane %v1051, 4
        %v1207 = vrot.slane %v1094, 4
        %v1208 = vrot.slane %v1095, 4
        %v1213 = vrot.slane %v1131, 4
        %v1214 = vrot.slane %v1132, 4
        %v1219 = vrot.slane %v1175, 4
        %v1220 = vrot.slane %v1176, 4
        %v1223 = vsel %vm896, %v1028, %v1201
        %v1224 = vsel %vm896, %v1029, %v1202
        %v1225 = vsel %vm896, %v1072, %v1207
        %v1226 = vsel %vm896, %v1073, %v1208
        %v1227 = vsel %vm896, %v1109, %v1213
        %v1228 = vsel %vm896, %v1110, %v1214
        %v1229 = vsel %vm896, %v1153, %v1219
        %v1230 = vsel %vm896, %v1154, %v1220
        %v1231 = vld [vmem:[%s7] sm:$0xf]
        %v1233 = vsel %vm906, %v1231, 0
        %v1236 = vsel %vm896, %v1197, 0
        %v1239 = vsel %vm896, %v1198, 0
        %1241 = vmatprep.subr.mxu0 0.0
        %1242 = vmatpush1.msra.mxu0 0.0
        %1243 = vmatprep.subr.mxu0 0.0
        %1244 = vmatpush1.msra.mxu0 0.0
        %1245 = vmatprep.subr.mxu0 0.0
        %1246 = vmatpush1.msra.mxu0 0.0
        %1247 = vmatprep.subr.mxu0 0.0
        %1248 = vmatpush1.msra.mxu0 0.0
        %1249 = vmatprep.subr.mxu0 0.0
        %1250 = vmatpush1.msra.mxu0 0.0
        %1251 = vmatprep.subr.mxu0 0.0
        %1252 = vmatpush1.msra.mxu0 0.0
        %1253 = vmatprep.subr.mxu0 0.0
        %1254 = vmatpush1.msra.mxu0 0.0
        %1255 = vmatprep.subr.mxu0 0.0
        %1256 = vmatpush1.msra.mxu0 0.0
        %1257 = vmatprep.subr.mxu0 0.0
        %1258 = vmatpush1.msra.mxu0 0.0
        %1259 = vmatprep.subr.mxu0 0.0
        %1260 = vmatpush1.msra.mxu0 0.0
        %1261 = vmatprep.subr.mxu0 0.0
        %1262 = vmatpush1.msra.mxu0 0.0
        %1263 = vmatprep.subr.mxu0 %v1239
        %1264 = vmatpush1.msra.mxu0 %v1236
        %1265 = vmatprep.subr.mxu0 %v1230
        %1266 = vmatpush1.msra.mxu0 %v1229
        %1267 = vmatprep.subr.mxu0 %v1228
        %1268 = vmatpush1.msra.mxu0 %v1227
        %1269 = vmatprep.subr.mxu0 %v1226
        %1270 = vmatpush1.msra.mxu0 %v1225
        %1271 = vmatprep.subr.mxu0 %v1224
        %1272 = vmatpush1.msra.mxu0 %v1223
        %1273 = vmatprep.subr.mxu0 0.0
        %1274 = vmatpush2.msra.mxu0 0.0
        %1275 = vmatprep.subr.mxu0 0.0
        %1276 = vmatpush2.msra.mxu0 0.0
        %1277 = vmatprep.subr.mxu0 0.0
        %1278 = vmatpush2.msra.mxu0 0.0
        %1279 = vmatprep.subr.mxu0 0.0
        %1280 = vmatpush2.msra.mxu0 0.0
        %1281 = vmatprep.subr.mxu0 0.0
        %1282 = vmatpush2.msra.mxu0 0.0
        %1283 = vmatprep.subr.mxu0 0.0
        %1284 = vmatpush2.msra.mxu0 0.0
        %1285 = vmatprep.subr.mxu0 0.0
        %1286 = vmatpush2.msra.mxu0 0.0
        %1287 = vmatprep.subr.mxu0 0.0
        %1288 = vmatpush2.msra.mxu0 0.0
        %1289 = vmatprep.subr.mxu0 0.0
        %1290 = vmatpush2.msra.mxu0 0.0
        %1291 = vmatprep.subr.mxu0 0.0
        %1292 = vmatpush2.msra.mxu0 0.0
        %1293 = vmatprep.subr.mxu0 0.0
        %1294 = vmatpush2.msra.mxu0 0.0
        %1295 = vmatprep.subr.mxu0 0.0
        %1296 = vmatpush2.msra.mxu0 0.0
        %1297 = vmatprep.subr.mxu0 0.0
        %1298 = vmatpush2.msra.mxu0 0.0
        %1299 = vmatprep.subr.mxu0 0.0
        %1300 = vmatpush2.msra.mxu0 0.0
        %1301 = vmatprep.subr.mxu0 0.0
        %1302 = vmatpush2.msra.mxu0 0.0
        %1303 = vmatprep.subr.mxu0 0.0
        %1304 = vmatpush2.msra.mxu0 0.0
        %1305 = vmatprep.mubr.f32.mxu0 0.0
        %1306 = vmatmul.mubr.f32.gmra.mxu0 %v1233
        %v1307 = vpop.f32.mrf.mxu0
        %v1308 = vadd.f32 0.0, %v1307
        %v1309 = vpop.f32.mrf.mxu0
        %v1310 = vadd.f32 0.0, %v1309
        %1311 = vdwg.mxu0
        %1312 = vrot.lane.b32.xlu0 %v1308, 1
        %v1313 = vpop.permute.xlu0 %1312
        %1314 = vrot.lane.b32.xlu0 %v1310, 1
        %v1315 = vpop.permute.xlu0 %1314
        %v1316 = vsel %vm751, %v1313, %v1315
        %v1317 = vsel %vm751, %v1315, %v1313
        %v1318 = vadd.f32 %v1308, %v1317
        %v1319 = vadd.f32 %v1310, %v1316
        %1320 = vrot.lane.b32.xlu0 %v1308, 4
        %v1321 = vpop.permute.xlu0 %1320
        %1322 = vrot.lane.b32.xlu0 %v1310, 4
        %v1323 = vpop.permute.xlu0 %1322
        %v1324 = vsel %vm707, %v1321, %v1323
        %v1325 = vsel %vm707, %v1323, %v1321
        %v1326 = vadd.f32 %v1318, %v1325
        %v1327 = vadd.f32 %v1319, %v1324
        %1328 = vrot.lane.b32.xlu0 %v1308, 5
        %v1329 = vpop.permute.xlu0 %1328
        %1330 = vrot.lane.b32.xlu0 %v1310, 5
        %v1331 = vpop.permute.xlu0 %1330
        %v1332 = vsel %vm686, %v1329, %v1331
        %v1333 = vsel %vm686, %v1331, %v1329
        %v1334 = vadd.f32 %v1326, %v1333
        %v1335 = vadd.f32 %v1327, %v1332
        %v1336 = vld [vmem:[%s8] sm:$0xf]
        %1338 = vset.pattern.permute.xlu0 0
        %1339 = vperm.xlu0 %1338, %v1336
        %v1340 = vpop.permute.xlu0 %1339
        %v1342 = vmul.f32 %v1334, %v1340
        %v1343 = vmul.f32 %v1335, %v1340
        %1344 = vset.pattern.permute.xlu0 1
        %1345 = vperm.xlu0 %1344, %v1336
        %v1346 = vpop.permute.xlu0 %1345
        %v1348 = vadd.f32 %v1342, %v1346
        %v1349 = vadd.f32 %v1343, %v1346
        %v1350 = vadd.f32 %v678, %v1348
        %v1351 = vadd.f32 %v679, %v1349
        %v1352 = vadd.f32 %v1350, %v999
        %v1353 = vadd.f32 %v1351, %v1000
        %v1354 = vmul.f32 %v1352, 0.33333334
        %v1355 = vmul.f32 %v1353, 0.33333334
        %v1356 = vld [vmem:[%s11] sm:$0xff]
        %v1357 = vld [vmem:[%s11 + $0x8] sm:$0xff]
        %vm1358 = vcmask 31744
        %v1360 = vsel %vm1358, %v1356, 0
        %v1363 = vsel %vm1358, %v1357, 0
        %v1366 = vsel %vm896, %v1354, 0
        %v1369 = vsel %vm896, %v1355, 0
        %1371 = vmatprep.subr.mxu0 0.0
        %1372 = vmatpush1.msra.mxu0 0.0
        %1373 = vmatprep.subr.mxu0 0.0
        %1374 = vmatpush1.msra.mxu0 0.0
        %1375 = vmatprep.subr.mxu0 0.0
        %1376 = vmatpush1.msra.mxu0 0.0
        %1377 = vmatprep.subr.mxu0 0.0
        %1378 = vmatpush1.msra.mxu0 0.0
        %1379 = vmatprep.subr.mxu0 0.0
        %1380 = vmatpush1.msra.mxu0 0.0
        %1381 = vmatprep.subr.mxu0 0.0
        %1382 = vmatpush1.msra.mxu0 0.0
        %1383 = vmatprep.subr.mxu0 0.0
        %1384 = vmatpush1.msra.mxu0 0.0
        %1385 = vmatprep.subr.mxu0 0.0
        %1386 = vmatpush1.msra.mxu0 0.0
        %1387 = vmatprep.subr.mxu0 0.0
        %1388 = vmatpush1.msra.mxu0 0.0
        %1389 = vmatprep.subr.mxu0 0.0
        %1390 = vmatpush1.msra.mxu0 0.0
        %1391 = vmatprep.subr.mxu0 0.0
        %1392 = vmatpush1.msra.mxu0 0.0
        %1393 = vmatprep.subr.mxu0 0.0
        %1394 = vmatpush1.msra.mxu0 0.0
        %1395 = vmatprep.subr.mxu0 0.0
        %1396 = vmatpush1.msra.mxu0 0.0
        %1397 = vmatprep.subr.mxu0 0.0
        %1398 = vmatpush1.msra.mxu0 0.0
        %1399 = vmatprep.subr.mxu0 0.0
        %1400 = vmatpush1.msra.mxu0 0.0
        %1401 = vmatprep.subr.mxu0 %v1369
        %1402 = vmatpush1.msra.mxu0 %v1366
        %1403 = vmatprep.subr.mxu0 0.0
        %1404 = vmatpush2.msra.mxu0 0.0
        %1405 = vmatprep.subr.mxu0 0.0
        %1406 = vmatpush2.msra.mxu0 0.0
        %1407 = vmatprep.subr.mxu0 0.0
        %1408 = vmatpush2.msra.mxu0 0.0
        %1409 = vmatprep.subr.mxu0 0.0
        %1410 = vmatpush2.msra.mxu0 0.0
        %1411 = vmatprep.subr.mxu0 0.0
        %1412 = vmatpush2.msra.mxu0 0.0
        %1413 = vmatprep.subr.mxu0 0.0
        %1414 = vmatpush2.msra.mxu0 0.0
        %1415 = vmatprep.subr.mxu0 0.0
        %1416 = vmatpush2.msra.mxu0 0.0
        %1417 = vmatprep.subr.mxu0 0.0
        %1418 = vmatpush2.msra.mxu0 0.0
        %1419 = vmatprep.subr.mxu0 0.0
        %1420 = vmatpush2.msra.mxu0 0.0
        %1421 = vmatprep.subr.mxu0 0.0
        %1422 = vmatpush2.msra.mxu0 0.0
        %1423 = vmatprep.subr.mxu0 0.0
        %1424 = vmatpush2.msra.mxu0 0.0
        %1425 = vmatprep.subr.mxu0 0.0
        %1426 = vmatpush2.msra.mxu0 0.0
        %1427 = vmatprep.subr.mxu0 0.0
        %1428 = vmatpush2.msra.mxu0 0.0
        %1429 = vmatprep.subr.mxu0 0.0
        %1430 = vmatpush2.msra.mxu0 0.0
        %1431 = vmatprep.subr.mxu0 0.0
        %1432 = vmatpush2.msra.mxu0 0.0
        %1433 = vmatprep.subr.mxu0 0.0
        %1434 = vmatpush2.msra.mxu0 0.0
        %1435 = vmatprep.mubr.f32.mxu0 0.0
        %1436 = vmatmul.mubr.f32.gmra.mxu0 %v1360
        %v1437 = vpop.f32.mrf.mxu0
        %v1438 = vadd.f32 0.0, %v1437
        %v1439 = vpop.f32.mrf.mxu0
        %v1440 = vadd.f32 0.0, %v1439
        %1441 = vmatprep.mubr.f32.mxu0 0.0
        %1442 = vmatmul.mubr.f32.gmra.mxu0 %v1363
        %v1443 = vpop.f32.mrf.mxu0
        %v1444 = vadd.f32 0.0, %v1443
        %v1445 = vpop.f32.mrf.mxu0
        %v1446 = vadd.f32 0.0, %v1445
        %1447 = vdwg.mxu0
        %v1448 = vld [vmem:[%s12] sm:$0xff]
        %v1449 = vld [vmem:[%s12 + $0x8] sm:$0xff]
        %1451 = vset.pattern.permute.xlu0 0
        %1452 = vperm.xlu0 %1451, %v1448
        %v1453 = vpop.permute.xlu0 %1452
        %1456 = vset.pattern.permute.xlu0 0
        %1457 = vperm.xlu0 %1456, %v1449
        %v1458 = vpop.permute.xlu0 %1457
        %v1460 = vmul.f32 %v1438, %v1453
        %v1461 = vmul.f32 %v1440, %v1453
        %v1462 = vmul.f32 %v1444, %v1458
        %v1463 = vmul.f32 %v1446, %v1458
        %1464 = vset.pattern.permute.xlu0 1
        %1465 = vperm.xlu0 %1464, %v1448
        %v1466 = vpop.permute.xlu0 %1465
        %1468 = vset.pattern.permute.xlu0 1
        %1469 = vperm.xlu0 %1468, %v1449
        %v1470 = vpop.permute.xlu0 %1469
        %v1472 = vadd.f32 %v1460, %v1466
        %v1473 = vadd.f32 %v1461, %v1466
        %v1474 = vadd.f32 %v1462, %v1470
        %v1475 = vadd.f32 %v1463, %v1470
        %v1476 = vxor.u32 %v1472, 2147483648
        %v1477 = vxor.u32 %v1473, 2147483648
        %v1478 = vxor.u32 %v1474, 2147483648
        %v1479 = vxor.u32 %v1475, 2147483648
        %v1480 = vmul.f32 %v1476, 1.442695
        %v1481 = vpow.pop %v1480
        %v1482 = vmul.f32 %v1477, 1.442695
        %v1483 = vpow.pop %v1482
        %v1484 = vmul.f32 %v1478, 1.442695
        %v1485 = vpow.pop %v1484
        %v1486 = vmul.f32 %v1479, 1.442695
        %v1487 = vpow.pop %v1486
        %v1488 = vadd.f32 %v1481, 1.0
        %v1489 = vadd.f32 %v1483, 1.0
        %v1490 = vadd.f32 %v1485, 1.0
        %v1491 = vadd.f32 %v1487, 1.0
        %v1492 = vrcp.pop %v1488
        %v1493 = vmul.f32 1.0, %v1492
        %v1494 = vrcp.pop %v1489
        %v1495 = vmul.f32 1.0, %v1494
        %v1496 = vrcp.pop %v1490
        %v1497 = vmul.f32 1.0, %v1496
        %v1498 = vrcp.pop %v1491
        %v1499 = vmul.f32 1.0, %v1498
        %v1500 = vsub.f32 %v1493, 0.5
        %v1501 = vsub.f32 %v1495, 0.5
        %v1502 = vsub.f32 %v1497, 0.5
        %v1503 = vsub.f32 %v1499, 0.5
        %v1504 = vadd.f32 %v1500, %v1501
        %v1505 = vadd.f32 %v1502, %v1503
        %v1506 = vmul.f32 %v1504, 0.5
        %v1507 = vmul.f32 %v1505, 0.5
        %v1508 = vmul.f32 %v481, %v1506
        %v1509 = vmul.f32 %v482, %v1507
        %v1510 = vadd.f32 %v481, %v1508
        %v1511 = vadd.f32 %v482, %v1509
        %1512 = vst [vmem:[%s475] sm:$0xff] %v1510
        %1513 = vst [vmem:[%s475 + $0x8] sm:$0xff] %v1511
        %s1514 = sand.u32 %s315, 1
        %s1515 = scalar_lea.sflag [#allocation4], %s1514
        %s1516 = sand.u32 %s315, 1
        %s1517 = smul.addr %s1516, 16
        %s1518 = scalar_lea.vmem [#allocation8], %s1517
        // Predicated region
        $region85: #{tpu_custom_call.1} parent=71 // pred_check
          %p1519 = pneg %p325
        $region86: #{tpu_custom_call.1} parent=71 // pred_check_branch
          %1521 = sbr.rel (%p1519) target = $region88
        $region87: #{tpu_custom_call.1} parent=71 // pred_region
          %s1523 = ssub.s32 256, 256
          %1524 = vsyncadd %s1515, %s1523
          %s1525 = smul.addr %s29, 2
          %s1526 = smul.addr %s1525, 128
          %s1527 = scalar_lea.hbm %s13, %s1526
          %s1528 = sshll.u32 %s1518, 4
          %s1529 = int_to_ptr.vmem [resolvable:$true] %s1528
          %1534 = dma.vmem_to_hbm [thread:$0]  %s1529, 256, %s1527, %s1515, 128, 128, 8
        $region88: #{tpu_custom_call.1} parent=71 // pred_fallthru
          _
      $region72: #{tpu_custom_call.1} parent=5 // pred_fallthru
        _
      %p1535 = scmp.le.s32.totalorder 2, %s24
      // Predicated region
      $region89: #{tpu_custom_call.1} parent=5 // pred_check
        %p1536 = pneg %p1535
      $region90: #{tpu_custom_call.1} parent=5 // pred_check_branch
        %1538 = sbr.rel (%p1536) target = $region92
      $region91: #{tpu_custom_call.1} parent=5 // pred_region
        %s1539 = ssub.s32 %s24, 2
        // Predicated region
        $region93: #{tpu_custom_call.1} parent=91 // pred_check
          %p1540 = pneg %p331
        $region94: #{tpu_custom_call.1} parent=91 // pred_check_branch
          %1542 = sbr.rel (%p1540) target = $region96
        $region95: #{tpu_custom_call.1} parent=91 // pred_region
          %s1543 = sand.u32 %s316, 1
          %s1544 = scalar_lea.sflag [#allocation4], %s1543
          %s1545 = sand.u32 %s316, 1
          %s1546 = smul.addr %s1545, 16
          %s1547 = scalar_lea.vmem [#allocation8], %s1546
          %1548 = dma.done %s1544, 256
        $region96: #{tpu_custom_call.1} parent=91 // pred_fallthru
          _
      $region92: #{tpu_custom_call.1} parent=5 // pred_fallthru
        _
    $region6: #{tpu_custom_call.1} parent=1 // loop_footer
      %s28 = sadd.s32 1, %s24
    $region7: #{tpu_custom_call.1} parent=1 // loop_footer_branch
      %23 = sbr.rel target = $region3
    $region8: #{tpu_custom_call.1} parent=1 // loop_exit
      _
    %1549 = vsyncpa [#allocation3], 1
    %s1550 = scalar_lea.sflag [#allocation3], 1
    %1551 = vsyncpa %s1550, 1
    %1552 = vsyncpa [#allocation6], 1
    %1553 = vsyncpa [#allocation4], 1
    %s1554 = scalar_lea.sflag [#allocation4], 1
    %1555 = vsyncpa %s1554, 1

</llo_original>
